<compile_context>
chip_gen: v7x
topology: tpu7x:2x2x1
jax: 0.10.0
libtpu: 0.0.40
codegen_flags: <defaults>
</compile_context>

<pallas_src>
import functools

import numpy as np
import jax
import jax.numpy as jnp
from jax.experimental import pallas as pl
from jax.experimental.pallas import tpu as pltpu


# -----------------------------------------------------------------------------
# Pallas kernel.  grid = (num_batch_tiles,); everything else is fused.
#
#   u_ref : (sl, BD)     bf16   BD = b_tile * d  (batch folded into lanes)
#   t_ref : (F*sl, sl)   bf16   stacked causal filter bank (VMEM-resident)
#   m_ref : (F*BD, BD)   bf16   block-diagonal projection bank (VMEM-resident)
#   o_ref : (sl, BD)     f32
#   uw_ref: (sl, F*BD)   bf16   VMEM scratch for the (filter,time) re-layout
# -----------------------------------------------------------------------------
def stu_kernel(u_ref, t_ref, m_ref, o_ref, uw_ref, *, num_filters, sl):
    bd = u_ref.shape[-1]

    # 1) Causal filtering of the whole batch tile by ALL filters at once:
    #    (F*sl, sl) @ (sl, BD) -> (F*sl, BD), f32 accumulation on the MXU.
    u_f = jnp.dot(t_ref[...], u_ref[...], preferred_element_type=jnp.float32)

    # 2) Re-layout: rows of u_f are (filter, time); lay each filter's (sl, BD)
    #    slab side by side along lanes so the projection below is ONE deep
    #    contraction.  Slices are static and lane/sublane aligned (BD == 128
    #    at production batch sizes, sl % 8 == 0); the f32->bf16 cast is fused
    #    into the store.  Pure VPU + load/store work, no MXU ops.
    for f in range(num_filters):
        uw_ref[:, f * bd:(f + 1) * bd] = (
            u_f[f * sl:(f + 1) * sl, :].astype(jnp.bfloat16))

    # 3) Projection over (filter, batch-in-tile, feature):
    #    (sl, F*BD) @ (F*BD, BD) -> (sl, BD); contraction depth F*BD.
    o_ref[...] = jnp.dot(uw_ref[...], m_ref[...],
                         preferred_element_type=jnp.float32)


# -----------------------------------------------------------------------------
# Host-side constant folding.
# -----------------------------------------------------------------------------
def hankel_eigs(sl, K):
    """Top-K eigenpairs of the spectral-SSM Hankel matrix (deterministic)."""
    i = np.arange(1, sl + 1, dtype=np.float64)
    z = i[:, None] + i[None, :]
    Z = 2.0 / (z ** 3 - z)
    evals, evecs = np.linalg.eigh(Z)            # ascending
    sigma = evals[-K:]                          # (K,)   top-K eigenvalues
    phi = evecs[:, -K:]                         # (sl,K) top-K eigenvectors
    return jnp.asarray(sigma, jnp.float32), jnp.asarray(phi, jnp.float32)


def build_banks(sigma, phi, M_phi_plus, M_phi_minus, M_u, b_tile):
    """Fold everything data-independent into two bf16 banks:
         * FFT conv      -> lower-triangular Toeplitz filters (exact causal conv)
         * sigma^(1/4)   -> folded into the projection matrices
         * ar_u          -> shift matrices appended to the filter bank,
                            M_u appended to the projection bank
         * batch tiling  -> projection replicated block-diagonally so b_tile
                            batch elements share the lane dimension
       Returns T_stack (F*sl, sl) and M_bd (F*b_tile*d, b_tile*d), both bf16."""
    phi_np = np.asarray(phi, np.float64)
    sl, K = phi_np.shape
    d = M_phi_plus.shape[-1]
    k_u = M_u.shape[0]
    F = 2 * K + k_u

    lag = np.arange(sl)[:, None] - np.arange(sl)[None, :]        # (sl, sl)
    causal = (lag >= 0).astype(np.float64)
    T_plus = phi_np[np.clip(lag, 0, sl - 1), :].transpose(2, 0, 1) * causal
    T_minus = T_plus * np.where(lag % 2 == 0, 1.0, -1.0)         # (-1)^(t-s)
    shifts = np.stack([(lag == j).astype(np.float64) for j in range(k_u)])
    filters = np.concatenate([T_plus, T_minus, shifts], axis=0)  # (F, sl, sl)

    sig_q = np.asarray(sigma, np.float64) ** 0.25
    proj = np.concatenate(
        [np.asarray(M_phi_plus, np.float64) * sig_q[:, None, None],
         np.asarray(M_phi_minus, np.float64) * sig_q[:, None, None],
         np.asarray(M_u, np.float64)], axis=0)                   # (F, d, d)

    # Block-diagonal replication over the batch tile: rows (f, b, i), cols (b, o).
    M_bd = np.zeros((F, b_tile, d, b_tile, d), np.float64)
    for b in range(b_tile):
        M_bd[:, b, :, b, :] = proj

    T_stack = jnp.asarray(filters.reshape(F * sl, sl).astype(np.float32),
                          jnp.bfloat16)
    M_bd = jnp.asarray(M_bd.reshape(F * b_tile * d, b_tile * d).astype(np.float32),
                       jnp.bfloat16)
    return T_stack, M_bd


def stu_forward(inputs, sigma, phi, M_phi_plus, M_phi_minus, M_u, b_tile=None):
    bsz, sl, d = inputs.shape
    K = phi.shape[1]
    k_u = M_u.shape[0]
    F = 2 * K + k_u
    assert sl % 8 == 0, "sequence length must be sublane-aligned"

    # Fold batch elements into the lane dimension so the output store (and the
    # in-kernel re-layout slabs) are a full 128 lanes wide.  The batch is
    # zero-padded up to a multiple of b_tile; the block-diagonal projection
    # keeps batch elements independent, so padded rows are exactly zero and
    # are sliced away at the end.
    if b_tile is None:
        b_tile = max(1, 128 // d) if d <= 128 else 1
    pad_b = (-bsz) % b_tile
    bsz_p = bsz + pad_b
    n_bt = bsz_p // b_tile
    bd = b_tile * d

    T_stack, M_bd = build_banks(sigma, phi, M_phi_plus, M_phi_minus, M_u, b_tile)

    # Lane-dense input layout (pure layout plumbing, done in the wrapper):
    # (bsz, sl, d) -> pad -> (n_bt, sl, b_tile*d), cast to bf16 for the MXU.
    x = inputs.astype(jnp.bfloat16)
    if pad_b:
        x = jnp.pad(x, ((0, pad_b), (0, 0), (0, 0)))
    u_wide = (x.reshape(n_bt, b_tile, sl, d)
               .transpose(0, 2, 1, 3)
               .reshape(n_bt, sl, bd))

    out = pl.pallas_call(
        functools.partial(stu_kernel, num_filters=F, sl=sl),
        out_shape=jax.ShapeDtypeStruct((n_bt, sl, bd), jnp.float32),
        grid_spec=pltpu.PrefetchScalarGridSpec(
            num_scalar_prefetch=0,
            grid=(n_bt,),
            in_specs=[
                # Per-tile activations; leading size-1 dim squeezed away.
                pl.BlockSpec((None, sl, bd), lambda b: (b, 0, 0)),
                # Constant banks: same block every step -> fetched once,
                # resident in VMEM for the whole batch loop.
                pl.BlockSpec((F * sl, sl), lambda b: (0, 0)),
                pl.BlockSpec((F * bd, bd), lambda b: (0, 0)),
            ],
            out_specs=pl.BlockSpec((None, sl, bd), lambda b: (b, 0, 0)),
            scratch_shapes=[pltpu.VMEM((sl, F * bd), jnp.bfloat16)],
        ),
        compiler_params=pltpu.CompilerParams(
            dimension_semantics=("parallel",),
            # Explicit budget, comfortably under v7x's 64 MiB physical VMEM.
            vmem_limit_bytes=32 * 1024 * 1024),
    )(u_wide, T_stack, M_bd)

    # Back to the module's (bsz, sl, d_out) layout; drop batch padding.
    out = (out.reshape(n_bt, sl, b_tile, d)
              .transpose(0, 2, 1, 3)
              .reshape(bsz_p, sl, d))
    return out[:bsz]


# -----------------------------------------------------------------------------
# Pure-JAX float32 reference (module math, highest matmul precision).
# -----------------------------------------------------------------------------
def stu_reference(inputs, sigma, phi, M_phi_plus, M_phi_minus, M_u):
    sl = inputs.shape[1]
    lag = jnp.arange(sl)[:, None] - jnp.arange(sl)[None, :]
    causal = lag >= 0
    phi_lag = phi[jnp.clip(lag, 0, sl - 1)]                      # (sl, sl, K)
    T_plus = jnp.where(causal[..., None], phi_lag, 0.0)
    T_minus = T_plus * jnp.where(lag % 2 == 0, 1.0, -1.0)[..., None]
    sr = sigma ** 0.25
    hi = jax.lax.Precision.HIGHEST
    U_plus = jnp.einsum("tsk,bsi->btki", T_plus, inputs, precision=hi)
    U_minus = jnp.einsum("tsk,bsi->btki", T_minus, inputs, precision=hi)
    spec = (jnp.einsum("btki,k,kio->bto", U_plus, sr, M_phi_plus, precision=hi)
            + jnp.einsum("btki,k,kio->bto", U_minus, sr, M_phi_minus, precision=hi))
    ar = jnp.zeros_like(spec)
    for j in range(M_u.shape[0]):
        shifted = jnp.pad(inputs, ((0, 0), (j, 0), (0, 0)))[:, :sl]
        ar = ar + jnp.einsum("bti,io->bto", shifted, M_u[j], precision=hi)
    return spec + ar


if __name__ == "__main__":
    # Small, STU-consistent shapes.
    bsz, sl, d_model = 2, 16, 32
    K, k_u, k_y = 8, 3, 2          # "Cannot shift" assert of the module holds

    key = jax.random.PRNGKey(0)
    k1, k2, k3, k4 = jax.random.split(key, 4)
    inputs = jax.random.normal(k1, (bsz, sl, d_model), jnp.float32)
    # Deterministic parameter init (torch.empty placeholders -> small normals).
    M_u = 0.02 * jax.random.normal(k2, (k_u, d_model, d_model), jnp.float32)
    M_phi_plus = 0.02 * jax.random.normal(k3, (K, d_model, d_model), jnp.float32)
    M_phi_minus = 0.02 * jax.random.normal(k4, (K, d_model, d_model), jnp.float32)
    # M_y is allocated but unused in the (use_ar_u=True, use_ar_y=False) config.
    M_y = jnp.zeros((d_model, k_y, d_model), jnp.float32)

    sigma, phi = hankel_eigs(sl, K)   # sigma: (K,), phi (eigenvectors): (sl, K)

    out = stu_forward(inputs, sigma, phi, M_phi_plus, M_phi_minus, M_u)
    out = jax.block_until_ready(out)

    ref = stu_reference(inputs, sigma, phi, M_phi_plus, M_phi_minus, M_u)
    # Tolerance sized for bf16 operand quantization (accumulation is f32).
    if not np.allclose(np.asarray(out), np.asarray(ref), rtol=3e-2, atol=3e-2):
        max_err = float(np.max(np.abs(np.asarray(out) - np.asarray(ref))))
        raise AssertionError(
            f"Pallas STU output mismatch vs reference (max |err| = {max_err:.3e})")

    print("KERNEL_OK")
</pallas_src>

<mosaic_0001>
module attributes {stable_mosaic.version = 11 : i64} {
  func.func @stu_kernel(%arg0: i32, %arg1: memref<1x16x128xbf16, #tpu.memory_space<vmem>>, %arg2: memref<304x16xbf16, #tpu.memory_space<vmem>>, %arg3: memref<2432x128xbf16, #tpu.memory_space<vmem>>, %arg4: memref<1x16x128xf32, #tpu.memory_space<vmem>>, %arg5: memref<16x2432xbf16, #tpu.memory_space<vmem>>) attributes {dimension_semantics = [#tpu.dimension_semantics<parallel>], iteration_bounds = array<i64: 1>, scalar_prefetch = 0 : i64, scratch_operands = 1 : i64, tpu.core_type = #tpu.core_type<tc>, window_params = [{transform_indices = @transform_0, window_bounds = array<i64: 1, 16, 128>}, {pipeline_mode = #tpu.pipeline_mode<synchronous>, transform_indices = @transform_1, window_bounds = array<i64: 304, 16>}, {pipeline_mode = #tpu.pipeline_mode<synchronous>, transform_indices = @transform_2, window_bounds = array<i64: 2432, 128>}, {transform_indices = @transform_3, window_bounds = array<i64: 1, 16, 128>}]} {
    %c0 = arith.constant 0 : index
    %c0_0 = arith.constant 0 : index
    %0 = vector.load %arg2[%c0, %c0_0] : memref<304x16xbf16, #tpu.memory_space<vmem>>, vector<304x16xbf16>
    %c0_1 = arith.constant 0 : index
    %c0_2 = arith.constant 0 : index
    %c0_3 = arith.constant 0 : index
    %1 = vector.load %arg1[%c0_1, %c0_2, %c0_3] : memref<1x16x128xbf16, #tpu.memory_space<vmem>>, vector<1x16x128xbf16>
    %2 = vector.shape_cast %1 : vector<1x16x128xbf16> to vector<16x128xbf16>
    %cst = arith.constant dense<0.000000e+00> : vector<304x128xf32>
    %3 = tpu.matmul %0, %2, %cst {dimension_numbers = #tpu.dot_dimension_numbers<[1], [0], [0], [1], [0, 0, 1, 1], [], []>} : vector<304x16xbf16>, vector<16x128xbf16>, vector<304x128xf32> -> vector<304x128xf32>
    %4 = vector.extract_strided_slice %3 {offsets = [0, 0], sizes = [16, 128], strides = [1, 1]} : vector<304x128xf32> to vector<16x128xf32>
    %5 = arith.truncf %4 : vector<16x128xf32> to vector<16x128xbf16>
    %c0_4 = arith.constant 0 : index
    %c0_5 = arith.constant 0 : index
    %6 = vector.load %arg5[%c0_4, %c0_5] : memref<16x2432xbf16, #tpu.memory_space<vmem>>, vector<16x128xbf16>
    tpu.vector_store %arg5[%c0_4, %c0_5], %5 {strides = array<i32>} : memref<16x2432xbf16, #tpu.memory_space<vmem>>, vector<16x128xbf16>,
    %7 = vector.extract_strided_slice %3 {offsets = [16, 0], sizes = [16, 128], strides = [1, 1]} : vector<304x128xf32> to vector<16x128xf32>
    %8 = arith.truncf %7 : vector<16x128xf32> to vector<16x128xbf16>
    %c0_6 = arith.constant 0 : index
    %c128 = arith.constant 128 : index
    %9 = vector.load %arg5[%c0_6, %c128] : memref<16x2432xbf16, #tpu.memory_space<vmem>>, vector<16x128xbf16>
    tpu.vector_store %arg5[%c0_6, %c128], %8 {strides = array<i32>} : memref<16x2432xbf16, #tpu.memory_space<vmem>>, vector<16x128xbf16>,
    %10 = vector.extract_strided_slice %3 {offsets = [32, 0], sizes = [16, 128], strides = [1, 1]} : vector<304x128xf32> to vector<16x128xf32>
    %11 = arith.truncf %10 : vector<16x128xf32> to vector<16x128xbf16>
    %c0_7 = arith.constant 0 : index
    %c256 = arith.constant 256 : index
    %12 = vector.load %arg5[%c0_7, %c256] : memref<16x2432xbf16, #tpu.memory_space<vmem>>, vector<16x128xbf16>
    tpu.vector_store %arg5[%c0_7, %c256], %11 {strides = array<i32>} : memref<16x2432xbf16, #tpu.memory_space<vmem>>, vector<16x128xbf16>,
    %13 = vector.extract_strided_slice %3 {offsets = [48, 0], sizes = [16, 128], strides = [1, 1]} : vector<304x128xf32> to vector<16x128xf32>
    %14 = arith.truncf %13 : vector<16x128xf32> to vector<16x128xbf16>
    %c0_8 = arith.constant 0 : index
    %c384 = arith.constant 384 : index
    %15 = vector.load %arg5[%c0_8, %c384] : memref<16x2432xbf16, #tpu.memory_space<vmem>>, vector<16x128xbf16>
    tpu.vector_store %arg5[%c0_8, %c384], %14 {strides = array<i32>} : memref<16x2432xbf16, #tpu.memory_space<vmem>>, vector<16x128xbf16>,
    %16 = vector.extract_strided_slice %3 {offsets = [64, 0], sizes = [16, 128], strides = [1, 1]} : vector<304x128xf32> to vector<16x128xf32>
    %17 = arith.truncf %16 : vector<16x128xf32> to vector<16x128xbf16>
    %c0_9 = arith.constant 0 : index
    %c512 = arith.constant 512 : index
    %18 = vector.load %arg5[%c0_9, %c512] : memref<16x2432xbf16, #tpu.memory_space<vmem>>, vector<16x128xbf16>
    tpu.vector_store %arg5[%c0_9, %c512], %17 {strides = array<i32>} : memref<16x2432xbf16, #tpu.memory_space<vmem>>, vector<16x128xbf16>,
    %19 = vector.extract_strided_slice %3 {offsets = [80, 0], sizes = [16, 128], strides = [1, 1]} : vector<304x128xf32> to vector<16x128xf32>
    %20 = arith.truncf %19 : vector<16x128xf32> to vector<16x128xbf16>
    %c0_10 = arith.constant 0 : index
    %c640 = arith.constant 640 : index
    %21 = vector.load %arg5[%c0_10, %c640] : memref<16x2432xbf16, #tpu.memory_space<vmem>>, vector<16x128xbf16>
    tpu.vector_store %arg5[%c0_10, %c640], %20 {strides = array<i32>} : memref<16x2432xbf16, #tpu.memory_space<vmem>>, vector<16x128xbf16>,
    %22 = vector.extract_strided_slice %3 {offsets = [96, 0], sizes = [16, 128], strides = [1, 1]} : vector<304x128xf32> to vector<16x128xf32>
    %23 = arith.truncf %22 : vector<16x128xf32> to vector<16x128xbf16>
    %c0_11 = arith.constant 0 : index
    %c768 = arith.constant 768 : index
    %24 = vector.load %arg5[%c0_11, %c768] : memref<16x2432xbf16, #tpu.memory_space<vmem>>, vector<16x128xbf16>
    tpu.vector_store %arg5[%c0_11, %c768], %23 {strides = array<i32>} : memref<16x2432xbf16, #tpu.memory_space<vmem>>, vector<16x128xbf16>,
    %25 = vector.extract_strided_slice %3 {offsets = [112, 0], sizes = [16, 128], strides = [1, 1]} : vector<304x128xf32> to vector<16x128xf32>
    %26 = arith.truncf %25 : vector<16x128xf32> to vector<16x128xbf16>
    %c0_12 = arith.constant 0 : index
    %c896 = arith.constant 896 : index
    %27 = vector.load %arg5[%c0_12, %c896] : memref<16x2432xbf16, #tpu.memory_space<vmem>>, vector<16x128xbf16>
    tpu.vector_store %arg5[%c0_12, %c896], %26 {strides = array<i32>} : memref<16x2432xbf16, #tpu.memory_space<vmem>>, vector<16x128xbf16>,
    %28 = vector.extract_strided_slice %3 {offsets = [128, 0], sizes = [16, 128], strides = [1, 1]} : vector<304x128xf32> to vector<16x128xf32>
    %29 = arith.truncf %28 : vector<16x128xf32> to vector<16x128xbf16>
    %c0_13 = arith.constant 0 : index
    %c1024 = arith.constant 1024 : index
    %30 = vector.load %arg5[%c0_13, %c1024] : memref<16x2432xbf16, #tpu.memory_space<vmem>>, vector<16x128xbf16>
    tpu.vector_store %arg5[%c0_13, %c1024], %29 {strides = array<i32>} : memref<16x2432xbf16, #tpu.memory_space<vmem>>, vector<16x128xbf16>,
    %31 = vector.extract_strided_slice %3 {offsets = [144, 0], sizes = [16, 128], strides = [1, 1]} : vector<304x128xf32> to vector<16x128xf32>
    %32 = arith.truncf %31 : vector<16x128xf32> to vector<16x128xbf16>
    %c0_14 = arith.constant 0 : index
    %c1152 = arith.constant 1152 : index
    %33 = vector.load %arg5[%c0_14, %c1152] : memref<16x2432xbf16, #tpu.memory_space<vmem>>, vector<16x128xbf16>
    tpu.vector_store %arg5[%c0_14, %c1152], %32 {strides = array<i32>} : memref<16x2432xbf16, #tpu.memory_space<vmem>>, vector<16x128xbf16>,
    %34 = vector.extract_strided_slice %3 {offsets = [160, 0], sizes = [16, 128], strides = [1, 1]} : vector<304x128xf32> to vector<16x128xf32>
    %35 = arith.truncf %34 : vector<16x128xf32> to vector<16x128xbf16>
    %c0_15 = arith.constant 0 : index
    %c1280 = arith.constant 1280 : index
    %36 = vector.load %arg5[%c0_15, %c1280] : memref<16x2432xbf16, #tpu.memory_space<vmem>>, vector<16x128xbf16>
    tpu.vector_store %arg5[%c0_15, %c1280], %35 {strides = array<i32>} : memref<16x2432xbf16, #tpu.memory_space<vmem>>, vector<16x128xbf16>,
    %37 = vector.extract_strided_slice %3 {offsets = [176, 0], sizes = [16, 128], strides = [1, 1]} : vector<304x128xf32> to vector<16x128xf32>
    %38 = arith.truncf %37 : vector<16x128xf32> to vector<16x128xbf16>
    %c0_16 = arith.constant 0 : index
    %c1408 = arith.constant 1408 : index
    %39 = vector.load %arg5[%c0_16, %c1408] : memref<16x2432xbf16, #tpu.memory_space<vmem>>, vector<16x128xbf16>
    tpu.vector_store %arg5[%c0_16, %c1408], %38 {strides = array<i32>} : memref<16x2432xbf16, #tpu.memory_space<vmem>>, vector<16x128xbf16>,
    %40 = vector.extract_strided_slice %3 {offsets = [192, 0], sizes = [16, 128], strides = [1, 1]} : vector<304x128xf32> to vector<16x128xf32>
    %41 = arith.truncf %40 : vector<16x128xf32> to vector<16x128xbf16>
    %c0_17 = arith.constant 0 : index
    %c1536 = arith.constant 1536 : index
    %42 = vector.load %arg5[%c0_17, %c1536] : memref<16x2432xbf16, #tpu.memory_space<vmem>>, vector<16x128xbf16>
    tpu.vector_store %arg5[%c0_17, %c1536], %41 {strides = array<i32>} : memref<16x2432xbf16, #tpu.memory_space<vmem>>, vector<16x128xbf16>,
    %43 = vector.extract_strided_slice %3 {offsets = [208, 0], sizes = [16, 128], strides = [1, 1]} : vector<304x128xf32> to vector<16x128xf32>
    %44 = arith.truncf %43 : vector<16x128xf32> to vector<16x128xbf16>
    %c0_18 = arith.constant 0 : index
    %c1664 = arith.constant 1664 : index
    %45 = vector.load %arg5[%c0_18, %c1664] : memref<16x2432xbf16, #tpu.memory_space<vmem>>, vector<16x128xbf16>
    tpu.vector_store %arg5[%c0_18, %c1664], %44 {strides = array<i32>} : memref<16x2432xbf16, #tpu.memory_space<vmem>>, vector<16x128xbf16>,
    %46 = vector.extract_strided_slice %3 {offsets = [224, 0], sizes = [16, 128], strides = [1, 1]} : vector<304x128xf32> to vector<16x128xf32>
    %47 = arith.truncf %46 : vector<16x128xf32> to vector<16x128xbf16>
    %c0_19 = arith.constant 0 : index
    %c1792 = arith.constant 1792 : index
    %48 = vector.load %arg5[%c0_19, %c1792] : memref<16x2432xbf16, #tpu.memory_space<vmem>>, vector<16x128xbf16>
    tpu.vector_store %arg5[%c0_19, %c1792], %47 {strides = array<i32>} : memref<16x2432xbf16, #tpu.memory_space<vmem>>, vector<16x128xbf16>,
    %49 = vector.extract_strided_slice %3 {offsets = [240, 0], sizes = [16, 128], strides = [1, 1]} : vector<304x128xf32> to vector<16x128xf32>
    %50 = arith.truncf %49 : vector<16x128xf32> to vector<16x128xbf16>
    %c0_20 = arith.constant 0 : index
    %c1920 = arith.constant 1920 : index
    %51 = vector.load %arg5[%c0_20, %c1920] : memref<16x2432xbf16, #tpu.memory_space<vmem>>, vector<16x128xbf16>
    tpu.vector_store %arg5[%c0_20, %c1920], %50 {strides = array<i32>} : memref<16x2432xbf16, #tpu.memory_space<vmem>>, vector<16x128xbf16>,
    %52 = vector.extract_strided_slice %3 {offsets = [256, 0], sizes = [16, 128], strides = [1, 1]} : vector<304x128xf32> to vector<16x128xf32>
    %53 = arith.truncf %52 : vector<16x128xf32> to vector<16x128xbf16>
    %c0_21 = arith.constant 0 : index
    %c2048 = arith.constant 2048 : index
    %54 = vector.load %arg5[%c0_21, %c2048] : memref<16x2432xbf16, #tpu.memory_space<vmem>>, vector<16x128xbf16>
    tpu.vector_store %arg5[%c0_21, %c2048], %53 {strides = array<i32>} : memref<16x2432xbf16, #tpu.memory_space<vmem>>, vector<16x128xbf16>,
    %55 = vector.extract_strided_slice %3 {offsets = [272, 0], sizes = [16, 128], strides = [1, 1]} : vector<304x128xf32> to vector<16x128xf32>
    %56 = arith.truncf %55 : vector<16x128xf32> to vector<16x128xbf16>
    %c0_22 = arith.constant 0 : index
    %c2176 = arith.constant 2176 : index
    %57 = vector.load %arg5[%c0_22, %c2176] : memref<16x2432xbf16, #tpu.memory_space<vmem>>, vector<16x128xbf16>
    tpu.vector_store %arg5[%c0_22, %c2176], %56 {strides = array<i32>} : memref<16x2432xbf16, #tpu.memory_space<vmem>>, vector<16x128xbf16>,
    %58 = vector.extract_strided_slice %3 {offsets = [288, 0], sizes = [16, 128], strides = [1, 1]} : vector<304x128xf32> to vector<16x128xf32>
    %59 = arith.truncf %58 : vector<16x128xf32> to vector<16x128xbf16>
    %c0_23 = arith.constant 0 : index
    %c2304 = arith.constant 2304 : index
    %60 = vector.load %arg5[%c0_23, %c2304] : memref<16x2432xbf16, #tpu.memory_space<vmem>>, vector<16x128xbf16>
    tpu.vector_store %arg5[%c0_23, %c2304], %59 {strides = array<i32>} : memref<16x2432xbf16, #tpu.memory_space<vmem>>, vector<16x128xbf16>,
    %c0_24 = arith.constant 0 : index
    %c0_25 = arith.constant 0 : index
    %61 = vector.load %arg5[%c0_24, %c0_25] : memref<16x2432xbf16, #tpu.memory_space<vmem>>, vector<16x2432xbf16>
    %c0_26 = arith.constant 0 : index
    %c0_27 = arith.constant 0 : index
    %62 = vector.load %arg3[%c0_26, %c0_27] : memref<2432x128xbf16, #tpu.memory_space<vmem>>, vector<2432x128xbf16>
    %cst_28 = arith.constant dense<0.000000e+00> : vector<16x128xf32>
    %63 = tpu.matmul %61, %62, %cst_28 {dimension_numbers = #tpu.dot_dimension_numbers<[1], [0], [0], [1], [0, 0, 1, 1], [], []>} : vector<16x2432xbf16>, vector<2432x128xbf16>, vector<16x128xf32> -> vector<16x128xf32>
    %c0_29 = arith.constant 0 : index
    %c0_30 = arith.constant 0 : index
    %c0_31 = arith.constant 0 : index
    %64 = vector.load %arg4[%c0_29, %c0_30, %c0_31] : memref<1x16x128xf32, #tpu.memory_space<vmem>>, vector<1x16x128xf32>
    %65 = vector.shape_cast %64 : vector<1x16x128xf32> to vector<16x128xf32>
    %66 = vector.shape_cast %63 : vector<16x128xf32> to vector<1x16x128xf32>
    tpu.vector_store %arg4[%c0_29, %c0_30, %c0_31], %66 {strides = array<i32>} : memref<1x16x128xf32, #tpu.memory_space<vmem>>, vector<1x16x128xf32>,
    return
  }
  func.func @transform_0(%arg0: i32) -> (i32, i32, i32) {
    %c0_i32 = arith.constant 0 : i32
    %c0_i32_0 = arith.constant 0 : i32
    %c0_i32_1 = arith.constant 0 : i32
    return %arg0, %c0_i32, %c0_i32_0 : i32, i32, i32
  }
  func.func @transform_1(%arg0: i32) -> (i32, i32) {
    %c0_i32 = arith.constant 0 : i32
    %c0_i32_0 = arith.constant 0 : i32
    %c0_i32_1 = arith.constant 0 : i32
    return %c0_i32, %c0_i32_0 : i32, i32
  }
  func.func @transform_2(%arg0: i32) -> (i32, i32) {
    %c0_i32 = arith.constant 0 : i32
    %c0_i32_0 = arith.constant 0 : i32
    %c0_i32_1 = arith.constant 0 : i32
    return %c0_i32, %c0_i32_0 : i32, i32
  }
  func.func @transform_3(%arg0: i32) -> (i32, i32, i32) {
    %c0_i32 = arith.constant 0 : i32
    %c0_i32_0 = arith.constant 0 : i32
    %c0_i32_1 = arith.constant 0 : i32
    return %arg0, %c0_i32, %c0_i32_0 : i32, i32, i32
  }
}

</mosaic_0001>

<llo_original>
// kernel: tpu_custom_call.1
$region0: #{tpu_custom_call.1}
  #allocation0 [shape = 'u32[]', space=smem, size = 0x4, offset = 0x4, fixed_abs, tag = 'smem constant byte address 0x4 - core index']
  #allocation1 [shape = 'u32[144,128]{1,0:T(1,128)}', space=vmem, size = 0x12000, scoped, tag = 'internal scratch']
  #allocation2 [shape = 'bf16[16,2432]{1,0:T(16,128)(2,1)}', space=vmem, size = 0x13000, scoped, tag = 'scratch operand']
  %s0 = inlined_call_operand.vmem [shape: bf16[1,16,128], index: 0, kind: input, shape index: {}]
  %s1 = inlined_call_operand.vmem [shape: bf16[304,16], index: 1, kind: input, shape index: {}]
  %s2 = inlined_call_operand.hbm [shape: bf16[2432,128], index: 2, kind: input, shape index: {}]
  %s3 = inlined_call_operand.hbm [shape: f32[1,16,128], index: 3, kind: output, shape index: {}]
  %s4 = sld [smem:[#allocation0]]
  $region26: #{tpu_custom_call.1} parent=0
    _
  %s6 = ssub.s32 1, %s4
  %s7 = scalar_select 0, %s6, %s4
  $region1: #{tpu_custom_call.1} parent=0
    #allocation3 [shape = 'u8[622592]{0}', space=vmem, size = 0x98000, scoped, tag = 'input window, operand 2, single buffered']
    #allocation4 [shape = 's32[1]{0}', space=sflag, size = 0x4, scoped, tag = 'scoped memory for tpu_custom_call.1']
    #allocation5 [shape = 's32[1]{0}', space=sflag, size = 0x4, scoped, tag = 'scoped memory for tpu_custom_call.1']
    #allocation6 [shape = 'u8[8192]{0}', space=vmem, size = 0x2000, scoped, tag = 'output window, operand 0, single buffered']
    %8 = vsyncpa [#allocation4], 0
    %9 = vsyncpa [#allocation5], 0
    // Predicated region
    $region2: #{tpu_custom_call.1} parent=1 // pred_check
      _
    $region3: #{tpu_custom_call.1} parent=1 // pred_check_branch
      %11 = sbr.rel (0) target = $region5
    $region4: #{tpu_custom_call.1} parent=1 // pred_region
      _
    $region5: #{tpu_custom_call.1} parent=1 // pred_fallthru
      _
    // Predicated region
    $region6: #{tpu_custom_call.1} parent=1 // pred_check
      _
    $region7: #{tpu_custom_call.1} parent=1 // pred_check_branch
      %13 = sbr.rel (0) target = $region9
    $region8: #{tpu_custom_call.1} parent=1 // pred_region
      _
    $region9: #{tpu_custom_call.1} parent=1 // pred_fallthru
      _
    // Predicated region
    $region10: #{tpu_custom_call.1} parent=1 // pred_check
      _
    $region11: #{tpu_custom_call.1} parent=1 // pred_check_branch
      %15 = sbr.rel (0) target = $region13
    $region12: #{tpu_custom_call.1} parent=1 // pred_region
      %s17 = ssub.s32 19456, 19456
      %18 = vsyncadd [#allocation4], %s17
      %s19 = sshll.u32 [#allocation3], 4
      %s20 = int_to_ptr.vmem [resolvable:$true] %s19
      %25 = dma.hbm_to_vmem [thread:$0]  %s2, 19456, %s20, [#allocation4], 64, 64, 4
    $region13: #{tpu_custom_call.1} parent=1 // pred_fallthru
      _
    // Predicated region
    $region14: #{tpu_custom_call.1} parent=1 // pred_check
      _
    $region15: #{tpu_custom_call.1} parent=1 // pred_check_branch
      %27 = sbr.rel (0) target = $region17
    $region16: #{tpu_custom_call.1} parent=1 // pred_region
      %28 = dma.done [#allocation4], 19456
    $region17: #{tpu_custom_call.1} parent=1 // pred_fallthru
      _
    %v30 = vld [vmem:[%s1] sm:$0xf]
    %v31 = vld [vmem:[%s1 + $0x4] sm:$0xf]
    %v32 = vld [vmem:[%s1 + $0x8] sm:$0xf]
    %v33 = vld [vmem:[%s1 + $0xc] sm:$0xf]
    %v34 = vld [vmem:[%s1 + $0x10] sm:$0xf]
    %v35 = vld [vmem:[%s1 + $0x14] sm:$0xf]
    %v36 = vld [vmem:[%s1 + $0x18] sm:$0xf]
    %v37 = vld [vmem:[%s1 + $0x1c] sm:$0xf]
    %v38 = vld [vmem:[%s1 + $0x20] sm:$0xf]
    %v39 = vld [vmem:[%s1 + $0x24] sm:$0xf]
    %v40 = vld [vmem:[%s1 + $0x28] sm:$0xf]
    %v41 = vld [vmem:[%s1 + $0x2c] sm:$0xf]
    %v42 = vld [vmem:[%s1 + $0x30] sm:$0xf]
    %v43 = vld [vmem:[%s1 + $0x34] sm:$0xf]
    %v44 = vld [vmem:[%s1 + $0x38] sm:$0xf]
    %v45 = vld [vmem:[%s1 + $0x3c] sm:$0xf]
    %v46 = vld [vmem:[%s1 + $0x40] sm:$0xf]
    %v47 = vld [vmem:[%s1 + $0x44] sm:$0xf]
    %v48 = vld [vmem:[%s1 + $0x48] sm:$0xf]
    %v49 = vld [vmem:[%s1 + $0x4c] sm:$0xf]
    %v50 = vld [vmem:[%s1 + $0x50] sm:$0xf]
    %v51 = vld [vmem:[%s1 + $0x54] sm:$0xf]
    %v52 = vld [vmem:[%s1 + $0x58] sm:$0xf]
    %v53 = vld [vmem:[%s1 + $0x5c] sm:$0xf]
    %v54 = vld [vmem:[%s1 + $0x60] sm:$0xf]
    %v55 = vld [vmem:[%s1 + $0x64] sm:$0xf]
    %v56 = vld [vmem:[%s1 + $0x68] sm:$0xf]
    %v57 = vld [vmem:[%s1 + $0x6c] sm:$0xf]
    %v58 = vld [vmem:[%s1 + $0x70] sm:$0xf]
    %v59 = vld [vmem:[%s1 + $0x74] sm:$0xf]
    %v60 = vld [vmem:[%s1 + $0x78] sm:$0xf]
    %v61 = vld [vmem:[%s1 + $0x7c] sm:$0xf]
    %v62 = vld [vmem:[%s1 + $0x80] sm:$0xf]
    %v63 = vld [vmem:[%s1 + $0x84] sm:$0xf]
    %v64 = vld [vmem:[%s1 + $0x88] sm:$0xf]
    %v65 = vld [vmem:[%s1 + $0x8c] sm:$0xf]
    %v66 = vld [vmem:[%s1 + $0x90] sm:$0xf]
    %v67 = vld [vmem:[%s1 + $0x94] sm:$0xf]
    %v68 = vld [vmem:[%s0] sm:$0xf]
    %v69 = vld [vmem:[%s0 + $0x4] sm:$0xf]
    %v108 = vunpack.c.l.b16 %v30
    %v109 = vunpack.c.l.b16 %v31
    %v110 = vunpack.c.l.b16 %v32
    %v111 = vunpack.c.l.b16 %v33
    %v112 = vunpack.c.l.b16 %v34
    %v113 = vunpack.c.l.b16 %v35
    %v114 = vunpack.c.l.b16 %v36
    %v115 = vunpack.c.l.b16 %v37
    %v116 = vunpack.c.l.b16 %v38
    %v117 = vunpack.c.l.b16 %v39
    %v118 = vunpack.c.l.b16 %v40
    %v119 = vunpack.c.l.b16 %v41
    %v120 = vunpack.c.l.b16 %v42
    %v121 = vunpack.c.l.b16 %v43
    %v122 = vunpack.c.l.b16 %v44
    %v123 = vunpack.c.l.b16 %v45
    %v124 = vunpack.c.l.b16 %v46
    %v125 = vunpack.c.l.b16 %v47
    %v126 = vunpack.c.l.b16 %v48
    %v127 = vunpack.c.l.b16 %v49
    %v128 = vunpack.c.l.b16 %v50
    %v129 = vunpack.c.l.b16 %v51
    %v130 = vunpack.c.l.b16 %v52
    %v131 = vunpack.c.l.b16 %v53
    %v132 = vunpack.c.l.b16 %v54
    %v133 = vunpack.c.l.b16 %v55
    %v134 = vunpack.c.l.b16 %v56
    %v135 = vunpack.c.l.b16 %v57
    %v136 = vunpack.c.l.b16 %v58
    %v137 = vunpack.c.l.b16 %v59
    %v138 = vunpack.c.l.b16 %v60
    %v139 = vunpack.c.l.b16 %v61
    %v140 = vunpack.c.l.b16 %v62
    %v141 = vunpack.c.l.b16 %v63
    %v142 = vunpack.c.l.b16 %v64
    %v143 = vunpack.c.l.b16 %v65
    %v144 = vunpack.c.l.b16 %v66
    %v145 = vunpack.c.l.b16 %v67
    %v146 = vpack.c.b16 %v109, %v108
    %v147 = vpack.c.b16 %v111, %v110
    %v148 = vpack.c.b16 %v113, %v112
    %v149 = vpack.c.b16 %v115, %v114
    %v150 = vpack.c.b16 %v117, %v116
    %v151 = vpack.c.b16 %v119, %v118
    %v152 = vpack.c.b16 %v121, %v120
    %v153 = vpack.c.b16 %v123, %v122
    %v154 = vpack.c.b16 %v125, %v124
    %v155 = vpack.c.b16 %v127, %v126
    %v156 = vpack.c.b16 %v129, %v128
    %v157 = vpack.c.b16 %v131, %v130
    %v158 = vpack.c.b16 %v133, %v132
    %v159 = vpack.c.b16 %v135, %v134
    %v160 = vpack.c.b16 %v137, %v136
    %v161 = vpack.c.b16 %v139, %v138
    %v162 = vpack.c.b16 %v141, %v140
    %v163 = vpack.c.b16 %v143, %v142
    %v164 = vpack.c.b16 %v145, %v144
    %v167 = vunpack.c.l.b16 %v68
    %v168 = vunpack.c.l.b16 %v69
    %v169 = vpack.c.b16 %v168, %v167
    %vm171 = vcmask 130048
    %v173 = vsel %vm171, %v146, 0
    %v176 = vsel %vm171, %v147, 0
    %v179 = vsel %vm171, %v148, 0
    %v182 = vsel %vm171, %v149, 0
    %v185 = vsel %vm171, %v150, 0
    %v188 = vsel %vm171, %v151, 0
    %v191 = vsel %vm171, %v152, 0
    %v194 = vsel %vm171, %v153, 0
    %v197 = vsel %vm171, %v154, 0
    %v200 = vsel %vm171, %v155, 0
    %v203 = vsel %vm171, %v156, 0
    %v206 = vsel %vm171, %v157, 0
    %v209 = vsel %vm171, %v158, 0
    %v212 = vsel %vm171, %v159, 0
    %v215 = vsel %vm171, %v160, 0
    %v218 = vsel %vm171, %v161, 0
    %v221 = vsel %vm171, %v162, 0
    %v224 = vsel %vm171, %v163, 0
    %v227 = vsel %vm171, %v164, 0
    %229 = vmatprep.subr.bf16.mxu0 0
    %230 = vmatpush1.bf16.msra.mxu0 %v169
    %231 = vmatprep.subr.bf16.mxu0 0
    %232 = vmatpush1.bf16.msra.mxu0 0
    %233 = vmatprep.subr.bf16.mxu0 0
    %234 = vmatpush1.bf16.msra.mxu0 0
    %235 = vmatprep.subr.bf16.mxu0 0
    %236 = vmatpush1.bf16.msra.mxu0 0
    %237 = vmatprep.subr.bf16.mxu0 0
    %238 = vmatpush1.bf16.msra.mxu0 0
    %239 = vmatprep.subr.bf16.mxu0 0
    %240 = vmatpush1.bf16.msra.mxu0 0
    %241 = vmatprep.subr.bf16.mxu0 0
    %242 = vmatpush1.bf16.msra.mxu0 0
    %243 = vmatprep.subr.bf16.mxu0 0
    %244 = vmatpush1.bf16.msra.mxu0 0
    %245 = vmatprep.subr.bf16.mxu0 0
    %246 = vmatpush1.bf16.msra.mxu0 0
    %247 = vmatprep.subr.bf16.mxu0 0
    %248 = vmatpush1.bf16.msra.mxu0 0
    %249 = vmatprep.subr.bf16.mxu0 0
    %250 = vmatpush1.bf16.msra.mxu0 0
    %251 = vmatprep.subr.bf16.mxu0 0
    %252 = vmatpush1.bf16.msra.mxu0 0
    %253 = vmatprep.subr.bf16.mxu0 0
    %254 = vmatpush1.bf16.msra.mxu0 0
    %255 = vmatprep.subr.bf16.mxu0 0
    %256 = vmatpush1.bf16.msra.mxu0 0
    %257 = vmatprep.subr.bf16.mxu0 0
    %258 = vmatpush1.bf16.msra.mxu0 0
    %259 = vmatprep.subr.bf16.mxu0 0
    %260 = vmatpush1.bf16.msra.mxu0 0
    %261 = vmatprep.mubr.bf16.mxu0 0
    %262 = vmatmul.mubr.bf16.gmra.mrb[0].mxu0 %v173
    %v263 = vpop.f32.mrb[0].mxu0
    %v264 = vadd.f32 0.0, %v263
    %v265 = vpop.f32.mrb[0].mxu0
    %v266 = vpop.f32.mrb[0].mxu0
    %v267 = vadd.f32 0.0, %v266
    %v268 = vpop.f32.mrb[0].mxu0
    %269 = vmatprep.mubr.bf16.mxu0 0
    %270 = vmatmul.mubr.bf16.gmra.mrb[0].mxu0 %v176
    %v271 = vpop.f32.mrb[0].mxu0
    %v272 = vadd.f32 0.0, %v271
    %v273 = vpop.f32.mrb[0].mxu0
    %v274 = vpop.f32.mrb[0].mxu0
    %v275 = vadd.f32 0.0, %v274
    %v276 = vpop.f32.mrb[0].mxu0
    %277 = vmatprep.mubr.bf16.mxu0 0
    %278 = vmatmul.mubr.bf16.gmra.mrb[0].mxu0 %v179
    %v279 = vpop.f32.mrb[0].mxu0
    %v280 = vadd.f32 0.0, %v279
    %v281 = vpop.f32.mrb[0].mxu0
    %v282 = vpop.f32.mrb[0].mxu0
    %v283 = vadd.f32 0.0, %v282
    %v284 = vpop.f32.mrb[0].mxu0
    %285 = vmatprep.mubr.bf16.mxu0 0
    %286 = vmatmul.mubr.bf16.gmra.mrb[0].mxu0 %v182
    %v287 = vpop.f32.mrb[0].mxu0
    %v288 = vadd.f32 0.0, %v287
    %v289 = vpop.f32.mrb[0].mxu0
    %v290 = vpop.f32.mrb[0].mxu0
    %v291 = vadd.f32 0.0, %v290
    %v292 = vpop.f32.mrb[0].mxu0
    %293 = vmatprep.mubr.bf16.mxu0 0
    %294 = vmatmul.mubr.bf16.gmra.mrb[0].mxu0 %v185
    %v295 = vpop.f32.mrb[0].mxu0
    %v296 = vadd.f32 0.0, %v295
    %v297 = vpop.f32.mrb[0].mxu0
    %v298 = vpop.f32.mrb[0].mxu0
    %v299 = vadd.f32 0.0, %v298
    %v300 = vpop.f32.mrb[0].mxu0
    %301 = vmatprep.mubr.bf16.mxu0 0
    %302 = vmatmul.mubr.bf16.gmra.mrb[0].mxu0 %v188
    %v303 = vpop.f32.mrb[0].mxu0
    %v304 = vadd.f32 0.0, %v303
    %v305 = vpop.f32.mrb[0].mxu0
    %v306 = vpop.f32.mrb[0].mxu0
    %v307 = vadd.f32 0.0, %v306
    %v308 = vpop.f32.mrb[0].mxu0
    %309 = vmatprep.mubr.bf16.mxu0 0
    %310 = vmatmul.mubr.bf16.gmra.mrb[0].mxu0 %v191
    %v311 = vpop.f32.mrb[0].mxu0
    %v312 = vadd.f32 0.0, %v311
    %v313 = vpop.f32.mrb[0].mxu0
    %v314 = vpop.f32.mrb[0].mxu0
    %v315 = vadd.f32 0.0, %v314
    %v316 = vpop.f32.mrb[0].mxu0
    %317 = vmatprep.mubr.bf16.mxu0 0
    %318 = vmatmul.mubr.bf16.gmra.mrb[0].mxu0 %v194
    %v319 = vpop.f32.mrb[0].mxu0
    %v320 = vadd.f32 0.0, %v319
    %v321 = vpop.f32.mrb[0].mxu0
    %v322 = vpop.f32.mrb[0].mxu0
    %v323 = vadd.f32 0.0, %v322
    %v324 = vpop.f32.mrb[0].mxu0
    %325 = vmatprep.mubr.bf16.mxu0 0
    %326 = vmatmul.mubr.bf16.gmra.mrb[0].mxu0 %v197
    %v327 = vpop.f32.mrb[0].mxu0
    %v328 = vadd.f32 0.0, %v327
    %v329 = vpop.f32.mrb[0].mxu0
    %v330 = vpop.f32.mrb[0].mxu0
    %v331 = vadd.f32 0.0, %v330
    %v332 = vpop.f32.mrb[0].mxu0
    %333 = vmatprep.mubr.bf16.mxu0 0
    %334 = vmatmul.mubr.bf16.gmra.mrb[0].mxu0 %v200
    %v335 = vpop.f32.mrb[0].mxu0
    %v336 = vadd.f32 0.0, %v335
    %v337 = vpop.f32.mrb[0].mxu0
    %v338 = vpop.f32.mrb[0].mxu0
    %v339 = vadd.f32 0.0, %v338
    %v340 = vpop.f32.mrb[0].mxu0
    %341 = vmatprep.mubr.bf16.mxu0 0
    %342 = vmatmul.mubr.bf16.gmra.mrb[0].mxu0 %v203
    %v343 = vpop.f32.mrb[0].mxu0
    %v344 = vadd.f32 0.0, %v343
    %v345 = vpop.f32.mrb[0].mxu0
    %v346 = vpop.f32.mrb[0].mxu0
    %v347 = vadd.f32 0.0, %v346
    %v348 = vpop.f32.mrb[0].mxu0
    %349 = vmatprep.mubr.bf16.mxu0 0
    %350 = vmatmul.mubr.bf16.gmra.mrb[0].mxu0 %v206
    %v351 = vpop.f32.mrb[0].mxu0
    %v352 = vadd.f32 0.0, %v351
    %v353 = vpop.f32.mrb[0].mxu0
    %v354 = vpop.f32.mrb[0].mxu0
    %v355 = vadd.f32 0.0, %v354
    %v356 = vpop.f32.mrb[0].mxu0
    %357 = vmatprep.mubr.bf16.mxu0 0
    %358 = vmatmul.mubr.bf16.gmra.mrb[0].mxu0 %v209
    %v359 = vpop.f32.mrb[0].mxu0
    %v360 = vadd.f32 0.0, %v359
    %v361 = vpop.f32.mrb[0].mxu0
    %v362 = vpop.f32.mrb[0].mxu0
    %v363 = vadd.f32 0.0, %v362
    %v364 = vpop.f32.mrb[0].mxu0
    %365 = vmatprep.mubr.bf16.mxu0 0
    %366 = vmatmul.mubr.bf16.gmra.mrb[0].mxu0 %v212
    %v367 = vpop.f32.mrb[0].mxu0
    %v368 = vadd.f32 0.0, %v367
    %v369 = vpop.f32.mrb[0].mxu0
    %v370 = vpop.f32.mrb[0].mxu0
    %v371 = vadd.f32 0.0, %v370
    %v372 = vpop.f32.mrb[0].mxu0
    %373 = vmatprep.mubr.bf16.mxu0 0
    %374 = vmatmul.mubr.bf16.gmra.mrb[0].mxu0 %v215
    %v375 = vpop.f32.mrb[0].mxu0
    %v376 = vadd.f32 0.0, %v375
    %v377 = vpop.f32.mrb[0].mxu0
    %v378 = vpop.f32.mrb[0].mxu0
    %v379 = vadd.f32 0.0, %v378
    %v380 = vpop.f32.mrb[0].mxu0
    %381 = vmatprep.mubr.bf16.mxu0 0
    %382 = vmatmul.mubr.bf16.gmra.mrb[0].mxu0 %v218
    %v383 = vpop.f32.mrb[0].mxu0
    %v384 = vadd.f32 0.0, %v383
    %v385 = vpop.f32.mrb[0].mxu0
    %v386 = vpop.f32.mrb[0].mxu0
    %v387 = vadd.f32 0.0, %v386
    %v388 = vpop.f32.mrb[0].mxu0
    %389 = vmatprep.mubr.bf16.mxu0 0
    %390 = vmatmul.mubr.bf16.gmra.mrb[0].mxu0 %v221
    %v391 = vpop.f32.mrb[0].mxu0
    %v392 = vadd.f32 0.0, %v391
    %v393 = vpop.f32.mrb[0].mxu0
    %v394 = vpop.f32.mrb[0].mxu0
    %v395 = vadd.f32 0.0, %v394
    %v396 = vpop.f32.mrb[0].mxu0
    %397 = vmatprep.mubr.bf16.mxu0 0
    %398 = vmatmul.mubr.bf16.gmra.mrb[0].mxu0 %v224
    %v399 = vpop.f32.mrb[0].mxu0
    %v400 = vadd.f32 0.0, %v399
    %v401 = vpop.f32.mrb[0].mxu0
    %v402 = vpop.f32.mrb[0].mxu0
    %v403 = vadd.f32 0.0, %v402
    %v404 = vpop.f32.mrb[0].mxu0
    %405 = vmatprep.mubr.bf16.mxu0 0
    %406 = vmatmul.mubr.bf16.gmra.mrb[0].mxu0 %v227
    %v407 = vpop.f32.mrb[0].mxu0
    %v408 = vadd.f32 0.0, %v407
    %v409 = vpop.f32.mrb[0].mxu0
    %v410 = vpop.f32.mrb[0].mxu0
    %v411 = vadd.f32 0.0, %v410
    %v412 = vpop.f32.mrb[0].mxu0
    %413 = vdwg.mxu0
    %v414 = vpack.c.bf16 %v267, %v264
    %415 = vst [vmem:[#allocation2] sm:$0xff] %v414
    %v416 = vpack.c.bf16 %v275, %v272
    %417 = vst [vmem:[#allocation2 + $0x8] sm:$0xff] %v416
    %v418 = vpack.c.bf16 %v283, %v280
    %419 = vst [vmem:[#allocation2 + $0x10] sm:$0xff] %v418
    %v420 = vpack.c.bf16 %v291, %v288
    %421 = vst [vmem:[#allocation2 + $0x18] sm:$0xff] %v420
    %v422 = vpack.c.bf16 %v299, %v296
    %423 = vst [vmem:[#allocation2 + $0x20] sm:$0xff] %v422
    %v424 = vpack.c.bf16 %v307, %v304
    %425 = vst [vmem:[#allocation2 + $0x28] sm:$0xff] %v424
    %v426 = vpack.c.bf16 %v315, %v312
    %427 = vst [vmem:[#allocation2 + $0x30] sm:$0xff] %v426
    %v428 = vpack.c.bf16 %v323, %v320
    %429 = vst [vmem:[#allocation2 + $0x38] sm:$0xff] %v428
    %v430 = vpack.c.bf16 %v331, %v328
    %431 = vst [vmem:[#allocation2 + $0x40] sm:$0xff] %v430
    %v432 = vpack.c.bf16 %v339, %v336
    %433 = vst [vmem:[#allocation2 + $0x48] sm:$0xff] %v432
    %v434 = vpack.c.bf16 %v347, %v344
    %435 = vst [vmem:[#allocation2 + $0x50] sm:$0xff] %v434
    %v436 = vpack.c.bf16 %v355, %v352
    %437 = vst [vmem:[#allocation2 + $0x58] sm:$0xff] %v436
    %v438 = vpack.c.bf16 %v363, %v360
    %439 = vst [vmem:[#allocation2 + $0x60] sm:$0xff] %v438
    %v440 = vpack.c.bf16 %v371, %v368
    %441 = vst [vmem:[#allocation2 + $0x68] sm:$0xff] %v440
    %v442 = vpack.c.bf16 %v379, %v376
    %443 = vst [vmem:[#allocation2 + $0x70] sm:$0xff] %v442
    %v444 = vpack.c.bf16 %v387, %v384
    %445 = vst [vmem:[#allocation2 + $0x78] sm:$0xff] %v444
    %v446 = vpack.c.bf16 %v395, %v392
    %447 = vst [vmem:[#allocation2 + $0x80] sm:$0xff] %v446
    %v448 = vpack.c.bf16 %v403, %v400
    %449 = vst [vmem:[#allocation2 + $0x88] sm:$0xff] %v448
    %v450 = vpack.c.bf16 %v411, %v408
    %451 = vst [vmem:[#allocation2 + $0x90] sm:$0xff] %v450
    %v452 = vld [vmem:[#allocation2] sm:$0xff]
    %v453 = vld [vmem:[#allocation2 + $0x8] sm:$0xff]
    %v454 = vld [vmem:[#allocation2 + $0x10] sm:$0xff]
    %v455 = vld [vmem:[#allocation2 + $0x18] sm:$0xff]
    %v456 = vld [vmem:[#allocation2 + $0x20] sm:$0xff]
    %v457 = vld [vmem:[#allocation2 + $0x28] sm:$0xff]
    %v458 = vld [vmem:[#allocation2 + $0x30] sm:$0xff]
    %v459 = vld [vmem:[#allocation2 + $0x38] sm:$0xff]
    %v460 = vld [vmem:[#allocation2 + $0x40] sm:$0xff]
    %v461 = vld [vmem:[#allocation2 + $0x48] sm:$0xff]
    %v462 = vld [vmem:[#allocation2 + $0x50] sm:$0xff]
    %v463 = vld [vmem:[#allocation2 + $0x58] sm:$0xff]
    %v464 = vld [vmem:[#allocation2 + $0x60] sm:$0xff]
    %v465 = vld [vmem:[#allocation2 + $0x68] sm:$0xff]
    %v466 = vld [vmem:[#allocation2 + $0x70] sm:$0xff]
    %v467 = vld [vmem:[#allocation2 + $0x78] sm:$0xff]
    %v468 = vld [vmem:[#allocation2 + $0x80] sm:$0xff]
    %v469 = vld [vmem:[#allocation2 + $0x88] sm:$0xff]
    %v470 = vld [vmem:[#allocation2 + $0x90] sm:$0xff]
    %v471 = vld [vmem:[#allocation3] sm:$0xf]
    %v472 = vld [vmem:[#allocation3 + $0x4] sm:$0xf]
    %v473 = vld [vmem:[#allocation3 + $0x8] sm:$0xf]
    %v474 = vld [vmem:[#allocation3 + $0xc] sm:$0xf]
    %v475 = vld [vmem:[#allocation3 + $0x10] sm:$0xf]
    %v476 = vld [vmem:[#allocation3 + $0x14] sm:$0xf]
    %v477 = vld [vmem:[#allocation3 + $0x18] sm:$0xf]
    %v478 = vld [vmem:[#allocation3 + $0x1c] sm:$0xf]
    %v479 = vld [vmem:[#allocation3 + $0x20] sm:$0xf]
    %v480 = vld [vmem:[#allocation3 + $0x24] sm:$0xf]
    %v481 = vld [vmem:[#allocation3 + $0x28] sm:$0xf]
    %v482 = vld [vmem:[#allocation3 + $0x2c] sm:$0xf]
    %v483 = vld [vmem:[#allocation3 + $0x30] sm:$0xf]
    %v484 = vld [vmem:[#allocation3 + $0x34] sm:$0xf]
    %v485 = vld [vmem:[#allocation3 + $0x38] sm:$0xf]
    %v486 = vld [vmem:[#allocation3 + $0x3c] sm:$0xf]
    %v487 = vld [vmem:[#allocation3 + $0x40] sm:$0xf]
    %v488 = vld [vmem:[#allocation3 + $0x44] sm:$0xf]
    %v489 = vld [vmem:[#allocation3 + $0x48] sm:$0xf]
    %v490 = vld [vmem:[#allocation3 + $0x4c] sm:$0xf]
    %v491 = vld [vmem:[#allocation3 + $0x50] sm:$0xf]
    %v492 = vld [vmem:[#allocation3 + $0x54] sm:$0xf]
    %v493 = vld [vmem:[#allocation3 + $0x58] sm:$0xf]
    %v494 = vld [vmem:[#allocation3 + $0x5c] sm:$0xf]
    %v495 = vld [vmem:[#allocation3 + $0x60] sm:$0xf]
    %v496 = vld [vmem:[#allocation3 + $0x64] sm:$0xf]
    %v497 = vld [vmem:[#allocation3 + $0x68] sm:$0xf]
    %v498 = vld [vmem:[#allocation3 + $0x6c] sm:$0xf]
    %v499 = vld [vmem:[#allocation3 + $0x70] sm:$0xf]
    %v500 = vld [vmem:[#allocation3 + $0x74] sm:$0xf]
    %v501 = vld [vmem:[#allocation3 + $0x78] sm:$0xf]
    %v502 = vld [vmem:[#allocation3 + $0x7c] sm:$0xf]
    %v503 = vld [vmem:[#allocation3 + $0x80] sm:$0xf]
    %v504 = vld [vmem:[#allocation3 + $0x84] sm:$0xf]
    %v505 = vld [vmem:[#allocation3 + $0x88] sm:$0xf]
    %v506 = vld [vmem:[#allocation3 + $0x8c] sm:$0xf]
    %v507 = vld [vmem:[#allocation3 + $0x90] sm:$0xf]
    %v508 = vld [vmem:[#allocation3 + $0x94] sm:$0xf]
    %v509 = vld [vmem:[#allocation3 + $0x98] sm:$0xf]
    %v510 = vld [vmem:[#allocation3 + $0x9c] sm:$0xf]
    %v511 = vld [vmem:[#allocation3 + $0xa0] sm:$0xf]
    %v512 = vld [vmem:[#allocation3 + $0xa4] sm:$0xf]
    %v513 = vld [vmem:[#allocation3 + $0xa8] sm:$0xf]
    %v514 = vld [vmem:[#allocation3 + $0xac] sm:$0xf]
    %v515 = vld [vmem:[#allocation3 + $0xb0] sm:$0xf]
    %v516 = vld [vmem:[#allocation3 + $0xb4] sm:$0xf]
    %v517 = vld [vmem:[#allocation3 + $0xb8] sm:$0xf]
    %v518 = vld [vmem:[#allocation3 + $0xbc] sm:$0xf]
    %v519 = vld [vmem:[#allocation3 + $0xc0] sm:$0xf]
    %v520 = vld [vmem:[#allocation3 + $0xc4] sm:$0xf]
    %v521 = vld [vmem:[#allocation3 + $0xc8] sm:$0xf]
    %v522 = vld [vmem:[#allocation3 + $0xcc] sm:$0xf]
    %v523 = vld [vmem:[#allocation3 + $0xd0] sm:$0xf]
    %v524 = vld [vmem:[#allocation3 + $0xd4] sm:$0xf]
    %v525 = vld [vmem:[#allocation3 + $0xd8] sm:$0xf]
    %v526 = vld [vmem:[#allocation3 + $0xdc] sm:$0xf]
    %v527 = vld [vmem:[#allocation3 + $0xe0] sm:$0xf]
    %v528 = vld [vmem:[#allocation3 + $0xe4] sm:$0xf]
    %v529 = vld [vmem:[#allocation3 + $0xe8] sm:$0xf]
    %v530 = vld [vmem:[#allocation3 + $0xec] sm:$0xf]
    %v531 = vld [vmem:[#allocation3 + $0xf0] sm:$0xf]
    %v532 = vld [vmem:[#allocation3 + $0xf4] sm:$0xf]
    %v533 = vld [vmem:[#allocation3 + $0xf8] sm:$0xf]
    %v534 = vld [vmem:[#allocation3 + $0xfc] sm:$0xf]
    %v535 = vld [vmem:[#allocation3 + $0x100] sm:$0xf]
    %v536 = vld [vmem:[#allocation3 + $0x104] sm:$0xf]
    %v537 = vld [vmem:[#allocation3 + $0x108] sm:$0xf]
    %v538 = vld [vmem:[#allocation3 + $0x10c] sm:$0xf]
    %v539 = vld [vmem:[#allocation3 + $0x110] sm:$0xf]
    %v540 = vld [vmem:[#allocation3 + $0x114] sm:$0xf]
    %v541 = vld [vmem:[#allocation3 + $0x118] sm:$0xf]
    %v542 = vld [vmem:[#allocation3 + $0x11c] sm:$0xf]
    %v543 = vld [vmem:[#allocation3 + $0x120] sm:$0xf]
    %v544 = vld [vmem:[#allocation3 + $0x124] sm:$0xf]
    %v545 = vld [vmem:[#allocation3 + $0x128] sm:$0xf]
    %v546 = vld [vmem:[#allocation3 + $0x12c] sm:$0xf]
    %v547 = vld [vmem:[#allocation3 + $0x130] sm:$0xf]
    %v548 = vld [vmem:[#allocation3 + $0x134] sm:$0xf]
    %v549 = vld [vmem:[#allocation3 + $0x138] sm:$0xf]
    %v550 = vld [vmem:[#allocation3 + $0x13c] sm:$0xf]
    %v551 = vld [vmem:[#allocation3 + $0x140] sm:$0xf]
    %v552 = vld [vmem:[#allocation3 + $0x144] sm:$0xf]
    %v553 = vld [vmem:[#allocation3 + $0x148] sm:$0xf]
    %v554 = vld [vmem:[#allocation3 + $0x14c] sm:$0xf]
    %v555 = vld [vmem:[#allocation3 + $0x150] sm:$0xf]
    %v556 = vld [vmem:[#allocation3 + $0x154] sm:$0xf]
    %v557 = vld [vmem:[#allocation3 + $0x158] sm:$0xf]
    %v558 = vld [vmem:[#allocation3 + $0x15c] sm:$0xf]
    %v559 = vld [vmem:[#allocation3 + $0x160] sm:$0xf]
    %v560 = vld [vmem:[#allocation3 + $0x164] sm:$0xf]
    %v561 = vld [vmem:[#allocation3 + $0x168] sm:$0xf]
    %v562 = vld [vmem:[#allocation3 + $0x16c] sm:$0xf]
    %v563 = vld [vmem:[#allocation3 + $0x170] sm:$0xf]
    %v564 = vld [vmem:[#allocation3 + $0x174] sm:$0xf]
    %v565 = vld [vmem:[#allocation3 + $0x178] sm:$0xf]
    %v566 = vld [vmem:[#allocation3 + $0x17c] sm:$0xf]
    %v567 = vld [vmem:[#allocation3 + $0x180] sm:$0xf]
    %v568 = vld [vmem:[#allocation3 + $0x184] sm:$0xf]
    %v569 = vld [vmem:[#allocation3 + $0x188] sm:$0xf]
    %v570 = vld [vmem:[#allocation3 + $0x18c] sm:$0xf]
    %v571 = vld [vmem:[#allocation3 + $0x190] sm:$0xf]
    %v572 = vld [vmem:[#allocation3 + $0x194] sm:$0xf]
    %v573 = vld [vmem:[#allocation3 + $0x198] sm:$0xf]
    %v574 = vld [vmem:[#allocation3 + $0x19c] sm:$0xf]
    %v575 = vld [vmem:[#allocation3 + $0x1a0] sm:$0xf]
    %v576 = vld [vmem:[#allocation3 + $0x1a4] sm:$0xf]
    %v577 = vld [vmem:[#allocation3 + $0x1a8] sm:$0xf]
    %v578 = vld [vmem:[#allocation3 + $0x1ac] sm:$0xf]
    %v579 = vld [vmem:[#allocation3 + $0x1b0] sm:$0xf]
    %v580 = vld [vmem:[#allocation3 + $0x1b4] sm:$0xf]
    %v581 = vld [vmem:[#allocation3 + $0x1b8] sm:$0xf]
    %v582 = vld [vmem:[#allocation3 + $0x1bc] sm:$0xf]
    %v583 = vld [vmem:[#allocation3 + $0x1c0] sm:$0xf]
    %v584 = vld [vmem:[#allocation3 + $0x1c4] sm:$0xf]
    %v585 = vld [vmem:[#allocation3 + $0x1c8] sm:$0xf]
    %v586 = vld [vmem:[#allocation3 + $0x1cc] sm:$0xf]
    %v587 = vld [vmem:[#allocation3 + $0x1d0] sm:$0xf]
    %v588 = vld [vmem:[#allocation3 + $0x1d4] sm:$0xf]
    %v589 = vld [vmem:[#allocation3 + $0x1d8] sm:$0xf]
    %v590 = vld [vmem:[#allocation3 + $0x1dc] sm:$0xf]
    %v591 = vld [vmem:[#allocation3 + $0x1e0] sm:$0xf]
    %v592 = vld [vmem:[#allocation3 + $0x1e4] sm:$0xf]
    %v593 = vld [vmem:[#allocation3 + $0x1e8] sm:$0xf]
    %v594 = vld [vmem:[#allocation3 + $0x1ec] sm:$0xf]
    %v595 = vld [vmem:[#allocation3 + $0x1f0] sm:$0xf]
    %v596 = vld [vmem:[#allocation3 + $0x1f4] sm:$0xf]
    %v597 = vld [vmem:[#allocation3 + $0x1f8] sm:$0xf]
    %v598 = vld [vmem:[#allocation3 + $0x1fc] sm:$0xf]
    %v599 = vld [vmem:[#allocation3 + $0x200] sm:$0xf]
    %v600 = vld [vmem:[#allocation3 + $0x204] sm:$0xf]
    %v601 = vld [vmem:[#allocation3 + $0x208] sm:$0xf]
    %v602 = vld [vmem:[#allocation3 + $0x20c] sm:$0xf]
    %v603 = vld [vmem:[#allocation3 + $0x210] sm:$0xf]
    %v604 = vld [vmem:[#allocation3 + $0x214] sm:$0xf]
    %v605 = vld [vmem:[#allocation3 + $0x218] sm:$0xf]
    %v606 = vld [vmem:[#allocation3 + $0x21c] sm:$0xf]
    %v607 = vld [vmem:[#allocation3 + $0x220] sm:$0xf]
    %v608 = vld [vmem:[#allocation3 + $0x224] sm:$0xf]
    %v609 = vld [vmem:[#allocation3 + $0x228] sm:$0xf]
    %v610 = vld [vmem:[#allocation3 + $0x22c] sm:$0xf]
    %v611 = vld [vmem:[#allocation3 + $0x230] sm:$0xf]
    %v612 = vld [vmem:[#allocation3 + $0x234] sm:$0xf]
    %v613 = vld [vmem:[#allocation3 + $0x238] sm:$0xf]
    %v614 = vld [vmem:[#allocation3 + $0x23c] sm:$0xf]
    %v615 = vld [vmem:[#allocation3 + $0x240] sm:$0xf]
    %v616 = vld [vmem:[#allocation3 + $0x244] sm:$0xf]
    %v617 = vld [vmem:[#allocation3 + $0x248] sm:$0xf]
    %v618 = vld [vmem:[#allocation3 + $0x24c] sm:$0xf]
    %v619 = vld [vmem:[#allocation3 + $0x250] sm:$0xf]
    %v620 = vld [vmem:[#allocation3 + $0x254] sm:$0xf]
    %v621 = vld [vmem:[#allocation3 + $0x258] sm:$0xf]
    %v622 = vld [vmem:[#allocation3 + $0x25c] sm:$0xf]
    %v623 = vld [vmem:[#allocation3 + $0x260] sm:$0xf]
    %v624 = vld [vmem:[#allocation3 + $0x264] sm:$0xf]
    %v625 = vld [vmem:[#allocation3 + $0x268] sm:$0xf]
    %v626 = vld [vmem:[#allocation3 + $0x26c] sm:$0xf]
    %v627 = vld [vmem:[#allocation3 + $0x270] sm:$0xf]
    %v628 = vld [vmem:[#allocation3 + $0x274] sm:$0xf]
    %v629 = vld [vmem:[#allocation3 + $0x278] sm:$0xf]
    %v630 = vld [vmem:[#allocation3 + $0x27c] sm:$0xf]
    %v631 = vld [vmem:[#allocation3 + $0x280] sm:$0xf]
    %v632 = vld [vmem:[#allocation3 + $0x284] sm:$0xf]
    %v633 = vld [vmem:[#allocation3 + $0x288] sm:$0xf]
    %v634 = vld [vmem:[#allocation3 + $0x28c] sm:$0xf]
    %v635 = vld [vmem:[#allocation3 + $0x290] sm:$0xf]
    %v636 = vld [vmem:[#allocation3 + $0x294] sm:$0xf]
    %v637 = vld [vmem:[#allocation3 + $0x298] sm:$0xf]
    %v638 = vld [vmem:[#allocation3 + $0x29c] sm:$0xf]
    %v639 = vld [vmem:[#allocation3 + $0x2a0] sm:$0xf]
    %v640 = vld [vmem:[#allocation3 + $0x2a4] sm:$0xf]
    %v641 = vld [vmem:[#allocation3 + $0x2a8] sm:$0xf]
    %v642 = vld [vmem:[#allocation3 + $0x2ac] sm:$0xf]
    %v643 = vld [vmem:[#allocation3 + $0x2b0] sm:$0xf]
    %v644 = vld [vmem:[#allocation3 + $0x2b4] sm:$0xf]
    %v645 = vld [vmem:[#allocation3 + $0x2b8] sm:$0xf]
    %v646 = vld [vmem:[#allocation3 + $0x2bc] sm:$0xf]
    %v647 = vld [vmem:[#allocation3 + $0x2c0] sm:$0xf]
    %v648 = vld [vmem:[#allocation3 + $0x2c4] sm:$0xf]
    %v649 = vld [vmem:[#allocation3 + $0x2c8] sm:$0xf]
    %v650 = vld [vmem:[#allocation3 + $0x2cc] sm:$0xf]
    %v651 = vld [vmem:[#allocation3 + $0x2d0] sm:$0xf]
    %v652 = vld [vmem:[#allocation3 + $0x2d4] sm:$0xf]
    %v653 = vld [vmem:[#allocation3 + $0x2d8] sm:$0xf]
    %v654 = vld [vmem:[#allocation3 + $0x2dc] sm:$0xf]
    %v655 = vld [vmem:[#allocation3 + $0x2e0] sm:$0xf]
    %v656 = vld [vmem:[#allocation3 + $0x2e4] sm:$0xf]
    %v657 = vld [vmem:[#allocation3 + $0x2e8] sm:$0xf]
    %v658 = vld [vmem:[#allocation3 + $0x2ec] sm:$0xf]
    %v659 = vld [vmem:[#allocation3 + $0x2f0] sm:$0xf]
    %v660 = vld [vmem:[#allocation3 + $0x2f4] sm:$0xf]
    %v661 = vld [vmem:[#allocation3 + $0x2f8] sm:$0xf]
    %v662 = vld [vmem:[#allocation3 + $0x2fc] sm:$0xf]
    %v663 = vld [vmem:[#allocation3 + $0x300] sm:$0xf]
    %v664 = vld [vmem:[#allocation3 + $0x304] sm:$0xf]
    %v665 = vld [vmem:[#allocation3 + $0x308] sm:$0xf]
    %v666 = vld [vmem:[#allocation3 + $0x30c] sm:$0xf]
    %v667 = vld [vmem:[#allocation3 + $0x310] sm:$0xf]
    %v668 = vld [vmem:[#allocation3 + $0x314] sm:$0xf]
    %v669 = vld [vmem:[#allocation3 + $0x318] sm:$0xf]
    %v670 = vld [vmem:[#allocation3 + $0x31c] sm:$0xf]
    %v671 = vld [vmem:[#allocation3 + $0x320] sm:$0xf]
    %v672 = vld [vmem:[#allocation3 + $0x324] sm:$0xf]
    %v673 = vld [vmem:[#allocation3 + $0x328] sm:$0xf]
    %v674 = vld [vmem:[#allocation3 + $0x32c] sm:$0xf]
    %v675 = vld [vmem:[#allocation3 + $0x330] sm:$0xf]
    %v676 = vld [vmem:[#allocation3 + $0x334] sm:$0xf]
    %v677 = vld [vmem:[#allocation3 + $0x338] sm:$0xf]
    %v678 = vld [vmem:[#allocation3 + $0x33c] sm:$0xf]
    %v679 = vld [vmem:[#allocation3 + $0x340] sm:$0xf]
    %v680 = vld [vmem:[#allocation3 + $0x344] sm:$0xf]
    %v681 = vld [vmem:[#allocation3 + $0x348] sm:$0xf]
    %v682 = vld [vmem:[#allocation3 + $0x34c] sm:$0xf]
    %v683 = vld [vmem:[#allocation3 + $0x350] sm:$0xf]
    %v684 = vld [vmem:[#allocation3 + $0x354] sm:$0xf]
    %v685 = vld [vmem:[#allocation3 + $0x358] sm:$0xf]
    %v686 = vld [vmem:[#allocation3 + $0x35c] sm:$0xf]
    %v687 = vld [vmem:[#allocation3 + $0x360] sm:$0xf]
    %v688 = vld [vmem:[#allocation3 + $0x364] sm:$0xf]
    %v689 = vld [vmem:[#allocation3 + $0x368] sm:$0xf]
    %v690 = vld [vmem:[#allocation3 + $0x36c] sm:$0xf]
    %v691 = vld [vmem:[#allocation3 + $0x370] sm:$0xf]
    %v692 = vld [vmem:[#allocation3 + $0x374] sm:$0xf]
    %v693 = vld [vmem:[#allocation3 + $0x378] sm:$0xf]
    %v694 = vld [vmem:[#allocation3 + $0x37c] sm:$0xf]
    %v695 = vld [vmem:[#allocation3 + $0x380] sm:$0xf]
    %v696 = vld [vmem:[#allocation3 + $0x384] sm:$0xf]
    %v697 = vld [vmem:[#allocation3 + $0x388] sm:$0xf]
    %v698 = vld [vmem:[#allocation3 + $0x38c] sm:$0xf]
    %v699 = vld [vmem:[#allocation3 + $0x390] sm:$0xf]
    %v700 = vld [vmem:[#allocation3 + $0x394] sm:$0xf]
    %v701 = vld [vmem:[#allocation3 + $0x398] sm:$0xf]
    %v702 = vld [vmem:[#allocation3 + $0x39c] sm:$0xf]
    %v703 = vld [vmem:[#allocation3 + $0x3a0] sm:$0xf]
    %v704 = vld [vmem:[#allocation3 + $0x3a4] sm:$0xf]
    %v705 = vld [vmem:[#allocation3 + $0x3a8] sm:$0xf]
    %v706 = vld [vmem:[#allocation3 + $0x3ac] sm:$0xf]
    %v707 = vld [vmem:[#allocation3 + $0x3b0] sm:$0xf]
    %v708 = vld [vmem:[#allocation3 + $0x3b4] sm:$0xf]
    %v709 = vld [vmem:[#allocation3 + $0x3b8] sm:$0xf]
    %v710 = vld [vmem:[#allocation3 + $0x3bc] sm:$0xf]
    %v711 = vld [vmem:[#allocation3 + $0x3c0] sm:$0xf]
    %v712 = vld [vmem:[#allocation3 + $0x3c4] sm:$0xf]
    %v713 = vld [vmem:[#allocation3 + $0x3c8] sm:$0xf]
    %v714 = vld [vmem:[#allocation3 + $0x3cc] sm:$0xf]
    %v715 = vld [vmem:[#allocation3 + $0x3d0] sm:$0xf]
    %v716 = vld [vmem:[#allocation3 + $0x3d4] sm:$0xf]
    %v717 = vld [vmem:[#allocation3 + $0x3d8] sm:$0xf]
    %v718 = vld [vmem:[#allocation3 + $0x3dc] sm:$0xf]
    %v719 = vld [vmem:[#allocation3 + $0x3e0] sm:$0xf]
    %v720 = vld [vmem:[#allocation3 + $0x3e4] sm:$0xf]
    %v721 = vld [vmem:[#allocation3 + $0x3e8] sm:$0xf]
    %v722 = vld [vmem:[#allocation3 + $0x3ec] sm:$0xf]
    %v723 = vld [vmem:[#allocation3 + $0x3f0] sm:$0xf]
    %v724 = vld [vmem:[#allocation3 + $0x3f4] sm:$0xf]
    %v725 = vld [vmem:[#allocation3 + $0x3f8] sm:$0xf]
    %v726 = vld [vmem:[#allocation3 + $0x3fc] sm:$0xf]
    %v727 = vld [vmem:[#allocation3 + $0x400] sm:$0xf]
    %v728 = vld [vmem:[#allocation3 + $0x404] sm:$0xf]
    %v729 = vld [vmem:[#allocation3 + $0x408] sm:$0xf]
    %v730 = vld [vmem:[#allocation3 + $0x40c] sm:$0xf]
    %v731 = vld [vmem:[#allocation3 + $0x410] sm:$0xf]
    %v732 = vld [vmem:[#allocation3 + $0x414] sm:$0xf]
    %v733 = vld [vmem:[#allocation3 + $0x418] sm:$0xf]
    %v734 = vld [vmem:[#allocation3 + $0x41c] sm:$0xf]
    %v735 = vld [vmem:[#allocation3 + $0x420] sm:$0xf]
    %v736 = vld [vmem:[#allocation3 + $0x424] sm:$0xf]
    %v737 = vld [vmem:[#allocation3 + $0x428] sm:$0xf]
    %v738 = vld [vmem:[#allocation3 + $0x42c] sm:$0xf]
    %v739 = vld [vmem:[#allocation3 + $0x430] sm:$0xf]
    %v740 = vld [vmem:[#allocation3 + $0x434] sm:$0xf]
    %v741 = vld [vmem:[#allocation3 + $0x438] sm:$0xf]
    %v742 = vld [vmem:[#allocation3 + $0x43c] sm:$0xf]
    %v743 = vld [vmem:[#allocation3 + $0x440] sm:$0xf]
    %v744 = vld [vmem:[#allocation3 + $0x444] sm:$0xf]
    %v745 = vld [vmem:[#allocation3 + $0x448] sm:$0xf]
    %v746 = vld [vmem:[#allocation3 + $0x44c] sm:$0xf]
    %v747 = vld [vmem:[#allocation3 + $0x450] sm:$0xf]
    %v748 = vld [vmem:[#allocation3 + $0x454] sm:$0xf]
    %v749 = vld [vmem:[#allocation3 + $0x458] sm:$0xf]
    %v750 = vld [vmem:[#allocation3 + $0x45c] sm:$0xf]
    %v751 = vld [vmem:[#allocation3 + $0x460] sm:$0xf]
    %v752 = vld [vmem:[#allocation3 + $0x464] sm:$0xf]
    %v753 = vld [vmem:[#allocation3 + $0x468] sm:$0xf]
    %v754 = vld [vmem:[#allocation3 + $0x46c] sm:$0xf]
    %v755 = vld [vmem:[#allocation3 + $0x470] sm:$0xf]
    %v756 = vld [vmem:[#allocation3 + $0x474] sm:$0xf]
    %v757 = vld [vmem:[#allocation3 + $0x478] sm:$0xf]
    %v758 = vld [vmem:[#allocation3 + $0x47c] sm:$0xf]
    %v759 = vld [vmem:[#allocation3 + $0x480] sm:$0xf]
    %v760 = vld [vmem:[#allocation3 + $0x484] sm:$0xf]
    %v761 = vld [vmem:[#allocation3 + $0x488] sm:$0xf]
    %v762 = vld [vmem:[#allocation3 + $0x48c] sm:$0xf]
    %v763 = vld [vmem:[#allocation3 + $0x490] sm:$0xf]
    %v764 = vld [vmem:[#allocation3 + $0x494] sm:$0xf]
    %v765 = vld [vmem:[#allocation3 + $0x498] sm:$0xf]
    %v766 = vld [vmem:[#allocation3 + $0x49c] sm:$0xf]
    %v767 = vld [vmem:[#allocation3 + $0x4a0] sm:$0xf]
    %v768 = vld [vmem:[#allocation3 + $0x4a4] sm:$0xf]
    %v769 = vld [vmem:[#allocation3 + $0x4a8] sm:$0xf]
    %v770 = vld [vmem:[#allocation3 + $0x4ac] sm:$0xf]
    %v771 = vld [vmem:[#allocation3 + $0x4b0] sm:$0xf]
    %v772 = vld [vmem:[#allocation3 + $0x4b4] sm:$0xf]
    %v773 = vld [vmem:[#allocation3 + $0x4b8] sm:$0xf]
    %v774 = vld [vmem:[#allocation3 + $0x4bc] sm:$0xf]
    %v1079 = vunpack.c.l.b16 %v471
    %v1080 = vunpack.c.l.b16 %v472
    %v1081 = vunpack.c.l.b16 %v473
    %v1082 = vunpack.c.l.b16 %v474
    %v1083 = vunpack.c.l.b16 %v475
    %v1084 = vunpack.c.l.b16 %v476
    %v1085 = vunpack.c.l.b16 %v477
    %v1086 = vunpack.c.l.b16 %v478
    %v1087 = vunpack.c.l.b16 %v479
    %v1088 = vunpack.c.l.b16 %v480
    %v1089 = vunpack.c.l.b16 %v481
    %v1090 = vunpack.c.l.b16 %v482
    %v1091 = vunpack.c.l.b16 %v483
    %v1092 = vunpack.c.l.b16 %v484
    %v1093 = vunpack.c.l.b16 %v485
    %v1094 = vunpack.c.l.b16 %v486
    %v1095 = vunpack.c.l.b16 %v487
    %v1096 = vunpack.c.l.b16 %v488
    %v1097 = vunpack.c.l.b16 %v489
    %v1098 = vunpack.c.l.b16 %v490
    %v1099 = vunpack.c.l.b16 %v491
    %v1100 = vunpack.c.l.b16 %v492
    %v1101 = vunpack.c.l.b16 %v493
    %v1102 = vunpack.c.l.b16 %v494
    %v1103 = vunpack.c.l.b16 %v495
    %v1104 = vunpack.c.l.b16 %v496
    %v1105 = vunpack.c.l.b16 %v497
    %v1106 = vunpack.c.l.b16 %v498
    %v1107 = vunpack.c.l.b16 %v499
    %v1108 = vunpack.c.l.b16 %v500
    %v1109 = vunpack.c.l.b16 %v501
    %v1110 = vunpack.c.l.b16 %v502
    %v1111 = vunpack.c.l.b16 %v503
    %v1112 = vunpack.c.l.b16 %v504
    %v1113 = vunpack.c.l.b16 %v505
    %v1114 = vunpack.c.l.b16 %v506
    %v1115 = vunpack.c.l.b16 %v507
    %v1116 = vunpack.c.l.b16 %v508
    %v1117 = vunpack.c.l.b16 %v509
    %v1118 = vunpack.c.l.b16 %v510
    %v1119 = vunpack.c.l.b16 %v511
    %v1120 = vunpack.c.l.b16 %v512
    %v1121 = vunpack.c.l.b16 %v513
    %v1122 = vunpack.c.l.b16 %v514
    %v1123 = vunpack.c.l.b16 %v515
    %v1124 = vunpack.c.l.b16 %v516
    %v1125 = vunpack.c.l.b16 %v517
    %v1126 = vunpack.c.l.b16 %v518
    %v1127 = vunpack.c.l.b16 %v519
    %v1128 = vunpack.c.l.b16 %v520
    %v1129 = vunpack.c.l.b16 %v521
    %v1130 = vunpack.c.l.b16 %v522
    %v1131 = vunpack.c.l.b16 %v523
    %v1132 = vunpack.c.l.b16 %v524
    %v1133 = vunpack.c.l.b16 %v525
    %v1134 = vunpack.c.l.b16 %v526
    %v1135 = vunpack.c.l.b16 %v527
    %v1136 = vunpack.c.l.b16 %v528
    %v1137 = vunpack.c.l.b16 %v529
    %v1138 = vunpack.c.l.b16 %v530
    %v1139 = vunpack.c.l.b16 %v531
    %v1140 = vunpack.c.l.b16 %v532
    %v1141 = vunpack.c.l.b16 %v533
    %v1142 = vunpack.c.l.b16 %v534
    %v1143 = vunpack.c.l.b16 %v535
    %v1144 = vunpack.c.l.b16 %v536
    %v1145 = vunpack.c.l.b16 %v537
    %v1146 = vunpack.c.l.b16 %v538
    %v1147 = vunpack.c.l.b16 %v539
    %v1148 = vunpack.c.l.b16 %v540
    %v1149 = vunpack.c.l.b16 %v541
    %v1150 = vunpack.c.l.b16 %v542
    %v1151 = vunpack.c.l.b16 %v543
    %v1152 = vunpack.c.l.b16 %v544
    %v1153 = vunpack.c.l.b16 %v545
    %v1154 = vunpack.c.l.b16 %v546
    %v1155 = vunpack.c.l.b16 %v547
    %v1156 = vunpack.c.l.b16 %v548
    %v1157 = vunpack.c.l.b16 %v549
    %v1158 = vunpack.c.l.b16 %v550
    %v1159 = vunpack.c.l.b16 %v551
    %v1160 = vunpack.c.l.b16 %v552
    %v1161 = vunpack.c.l.b16 %v553
    %v1162 = vunpack.c.l.b16 %v554
    %v1163 = vunpack.c.l.b16 %v555
    %v1164 = vunpack.c.l.b16 %v556
    %v1165 = vunpack.c.l.b16 %v557
    %v1166 = vunpack.c.l.b16 %v558
    %v1167 = vunpack.c.l.b16 %v559
    %v1168 = vunpack.c.l.b16 %v560
    %v1169 = vunpack.c.l.b16 %v561
    %v1170 = vunpack.c.l.b16 %v562
    %v1171 = vunpack.c.l.b16 %v563
    %v1172 = vunpack.c.l.b16 %v564
    %v1173 = vunpack.c.l.b16 %v565
    %v1174 = vunpack.c.l.b16 %v566
    %v1175 = vunpack.c.l.b16 %v567
    %v1176 = vunpack.c.l.b16 %v568
    %v1177 = vunpack.c.l.b16 %v569
    %v1178 = vunpack.c.l.b16 %v570
    %v1179 = vunpack.c.l.b16 %v571
    %v1180 = vunpack.c.l.b16 %v572
    %v1181 = vunpack.c.l.b16 %v573
    %v1182 = vunpack.c.l.b16 %v574
    %v1183 = vunpack.c.l.b16 %v575
    %v1184 = vunpack.c.l.b16 %v576
    %v1185 = vunpack.c.l.b16 %v577
    %v1186 = vunpack.c.l.b16 %v578
    %v1187 = vunpack.c.l.b16 %v579
    %v1188 = vunpack.c.l.b16 %v580
    %v1189 = vunpack.c.l.b16 %v581
    %v1190 = vunpack.c.l.b16 %v582
    %v1191 = vunpack.c.l.b16 %v583
    %v1192 = vunpack.c.l.b16 %v584
    %v1193 = vunpack.c.l.b16 %v585
    %v1194 = vunpack.c.l.b16 %v586
    %v1195 = vunpack.c.l.b16 %v587
    %v1196 = vunpack.c.l.b16 %v588
    %v1197 = vunpack.c.l.b16 %v589
    %v1198 = vunpack.c.l.b16 %v590
    %v1199 = vunpack.c.l.b16 %v591
    %v1200 = vunpack.c.l.b16 %v592
    %v1201 = vunpack.c.l.b16 %v593
    %v1202 = vunpack.c.l.b16 %v594
    %v1203 = vunpack.c.l.b16 %v595
    %v1204 = vunpack.c.l.b16 %v596
    %v1205 = vunpack.c.l.b16 %v597
    %v1206 = vunpack.c.l.b16 %v598
    %v1207 = vunpack.c.l.b16 %v599
    %v1208 = vunpack.c.l.b16 %v600
    %v1209 = vunpack.c.l.b16 %v601
    %v1210 = vunpack.c.l.b16 %v602
    %v1211 = vunpack.c.l.b16 %v603
    %v1212 = vunpack.c.l.b16 %v604
    %v1213 = vunpack.c.l.b16 %v605
    %v1214 = vunpack.c.l.b16 %v606
    %v1215 = vunpack.c.l.b16 %v607
    %v1216 = vunpack.c.l.b16 %v608
    %v1217 = vunpack.c.l.b16 %v609
    %v1218 = vunpack.c.l.b16 %v610
    %v1219 = vunpack.c.l.b16 %v611
    %v1220 = vunpack.c.l.b16 %v612
    %v1221 = vunpack.c.l.b16 %v613
    %v1222 = vunpack.c.l.b16 %v614
    %v1223 = vunpack.c.l.b16 %v615
    %v1224 = vunpack.c.l.b16 %v616
    %v1225 = vunpack.c.l.b16 %v617
    %v1226 = vunpack.c.l.b16 %v618
    %v1227 = vunpack.c.l.b16 %v619
    %v1228 = vunpack.c.l.b16 %v620
    %v1229 = vunpack.c.l.b16 %v621
    %v1230 = vunpack.c.l.b16 %v622
    %v1231 = vunpack.c.l.b16 %v623
    %v1232 = vunpack.c.l.b16 %v624
    %v1233 = vunpack.c.l.b16 %v625
    %v1234 = vunpack.c.l.b16 %v626
    %v1235 = vunpack.c.l.b16 %v627
    %v1236 = vunpack.c.l.b16 %v628
    %v1237 = vunpack.c.l.b16 %v629
    %v1238 = vunpack.c.l.b16 %v630
    %v1239 = vunpack.c.l.b16 %v631
    %v1240 = vunpack.c.l.b16 %v632
    %v1241 = vunpack.c.l.b16 %v633
    %v1242 = vunpack.c.l.b16 %v634
    %v1243 = vunpack.c.l.b16 %v635
    %v1244 = vunpack.c.l.b16 %v636
    %v1245 = vunpack.c.l.b16 %v637
    %v1246 = vunpack.c.l.b16 %v638
    %v1247 = vunpack.c.l.b16 %v639
    %v1248 = vunpack.c.l.b16 %v640
    %v1249 = vunpack.c.l.b16 %v641
    %v1250 = vunpack.c.l.b16 %v642
    %v1251 = vunpack.c.l.b16 %v643
    %v1252 = vunpack.c.l.b16 %v644
    %v1253 = vunpack.c.l.b16 %v645
    %v1254 = vunpack.c.l.b16 %v646
    %v1255 = vunpack.c.l.b16 %v647
    %v1256 = vunpack.c.l.b16 %v648
    %v1257 = vunpack.c.l.b16 %v649
    %v1258 = vunpack.c.l.b16 %v650
    %v1259 = vunpack.c.l.b16 %v651
    %v1260 = vunpack.c.l.b16 %v652
    %v1261 = vunpack.c.l.b16 %v653
    %v1262 = vunpack.c.l.b16 %v654
    %v1263 = vunpack.c.l.b16 %v655
    %v1264 = vunpack.c.l.b16 %v656
    %v1265 = vunpack.c.l.b16 %v657
    %v1266 = vunpack.c.l.b16 %v658
    %v1267 = vunpack.c.l.b16 %v659
    %v1268 = vunpack.c.l.b16 %v660
    %v1269 = vunpack.c.l.b16 %v661
    %v1270 = vunpack.c.l.b16 %v662
    %v1271 = vunpack.c.l.b16 %v663
    %v1272 = vunpack.c.l.b16 %v664
    %v1273 = vunpack.c.l.b16 %v665
    %v1274 = vunpack.c.l.b16 %v666
    %v1275 = vunpack.c.l.b16 %v667
    %v1276 = vunpack.c.l.b16 %v668
    %v1277 = vunpack.c.l.b16 %v669
    %v1278 = vunpack.c.l.b16 %v670
    %v1279 = vunpack.c.l.b16 %v671
    %v1280 = vunpack.c.l.b16 %v672
    %v1281 = vunpack.c.l.b16 %v673
    %v1282 = vunpack.c.l.b16 %v674
    %v1283 = vunpack.c.l.b16 %v675
    %v1284 = vunpack.c.l.b16 %v676
    %v1285 = vunpack.c.l.b16 %v677
    %v1286 = vunpack.c.l.b16 %v678
    %v1287 = vunpack.c.l.b16 %v679
    %v1288 = vunpack.c.l.b16 %v680
    %v1289 = vunpack.c.l.b16 %v681
    %v1290 = vunpack.c.l.b16 %v682
    %v1291 = vunpack.c.l.b16 %v683
    %v1292 = vunpack.c.l.b16 %v684
    %v1293 = vunpack.c.l.b16 %v685
    %v1294 = vunpack.c.l.b16 %v686
    %v1295 = vunpack.c.l.b16 %v687
    %v1296 = vunpack.c.l.b16 %v688
    %v1297 = vunpack.c.l.b16 %v689
    %v1298 = vunpack.c.l.b16 %v690
    %v1299 = vunpack.c.l.b16 %v691
    %v1300 = vunpack.c.l.b16 %v692
    %v1301 = vunpack.c.l.b16 %v693
    %v1302 = vunpack.c.l.b16 %v694
    %v1303 = vunpack.c.l.b16 %v695
    %v1304 = vunpack.c.l.b16 %v696
    %v1305 = vunpack.c.l.b16 %v697
    %v1306 = vunpack.c.l.b16 %v698
    %v1307 = vunpack.c.l.b16 %v699
    %v1308 = vunpack.c.l.b16 %v700
    %v1309 = vunpack.c.l.b16 %v701
    %v1310 = vunpack.c.l.b16 %v702
    %v1311 = vunpack.c.l.b16 %v703
    %v1312 = vunpack.c.l.b16 %v704
    %v1313 = vunpack.c.l.b16 %v705
    %v1314 = vunpack.c.l.b16 %v706
    %v1315 = vunpack.c.l.b16 %v707
    %v1316 = vunpack.c.l.b16 %v708
    %v1317 = vunpack.c.l.b16 %v709
    %v1318 = vunpack.c.l.b16 %v710
    %v1319 = vunpack.c.l.b16 %v711
    %v1320 = vunpack.c.l.b16 %v712
    %v1321 = vunpack.c.l.b16 %v713
    %v1322 = vunpack.c.l.b16 %v714
    %v1323 = vunpack.c.l.b16 %v715
    %v1324 = vunpack.c.l.b16 %v716
    %v1325 = vunpack.c.l.b16 %v717
    %v1326 = vunpack.c.l.b16 %v718
    %v1327 = vunpack.c.l.b16 %v719
    %v1328 = vunpack.c.l.b16 %v720
    %v1329 = vunpack.c.l.b16 %v721
    %v1330 = vunpack.c.l.b16 %v722
    %v1331 = vunpack.c.l.b16 %v723
    %v1332 = vunpack.c.l.b16 %v724
    %v1333 = vunpack.c.l.b16 %v725
    %v1334 = vunpack.c.l.b16 %v726
    %v1335 = vunpack.c.l.b16 %v727
    %v1336 = vunpack.c.l.b16 %v728
    %v1337 = vunpack.c.l.b16 %v729
    %v1338 = vunpack.c.l.b16 %v730
    %v1339 = vunpack.c.l.b16 %v731
    %v1340 = vunpack.c.l.b16 %v732
    %v1341 = vunpack.c.l.b16 %v733
    %v1342 = vunpack.c.l.b16 %v734
    %v1343 = vunpack.c.l.b16 %v735
    %v1344 = vunpack.c.l.b16 %v736
    %v1345 = vunpack.c.l.b16 %v737
    %v1346 = vunpack.c.l.b16 %v738
    %v1347 = vunpack.c.l.b16 %v739
    %v1348 = vunpack.c.l.b16 %v740
    %v1349 = vunpack.c.l.b16 %v741
    %v1350 = vunpack.c.l.b16 %v742
    %v1351 = vunpack.c.l.b16 %v743
    %v1352 = vunpack.c.l.b16 %v744
    %v1353 = vunpack.c.l.b16 %v745
    %v1354 = vunpack.c.l.b16 %v746
    %v1355 = vunpack.c.l.b16 %v747
    %v1356 = vunpack.c.l.b16 %v748
    %v1357 = vunpack.c.l.b16 %v749
    %v1358 = vunpack.c.l.b16 %v750
    %v1359 = vunpack.c.l.b16 %v751
    %v1360 = vunpack.c.l.b16 %v752
    %v1361 = vunpack.c.l.b16 %v753
    %v1362 = vunpack.c.l.b16 %v754
    %v1363 = vunpack.c.l.b16 %v755
    %v1364 = vunpack.c.l.b16 %v756
    %v1365 = vunpack.c.l.b16 %v757
    %v1366 = vunpack.c.l.b16 %v758
    %v1367 = vunpack.c.l.b16 %v759
    %v1368 = vunpack.c.l.b16 %v760
    %v1369 = vunpack.c.l.b16 %v761
    %v1370 = vunpack.c.l.b16 %v762
    %v1371 = vunpack.c.l.b16 %v763
    %v1372 = vunpack.c.l.b16 %v764
    %v1373 = vunpack.c.l.b16 %v765
    %v1374 = vunpack.c.l.b16 %v766
    %v1375 = vunpack.c.l.b16 %v767
    %v1376 = vunpack.c.l.b16 %v768
    %v1377 = vunpack.c.l.b16 %v769
    %v1378 = vunpack.c.l.b16 %v770
    %v1379 = vunpack.c.l.b16 %v771
    %v1380 = vunpack.c.l.b16 %v772
    %v1381 = vunpack.c.l.b16 %v773
    %v1382 = vunpack.c.l.b16 %v774
    %v1383 = vpack.c.b16 %v1080, %v1079
    %v1384 = vpack.c.b16 %v1082, %v1081
    %v1385 = vpack.c.b16 %v1084, %v1083
    %v1386 = vpack.c.b16 %v1086, %v1085
    %v1387 = vpack.c.b16 %v1088, %v1087
    %v1388 = vpack.c.b16 %v1090, %v1089
    %v1389 = vpack.c.b16 %v1092, %v1091
    %v1390 = vpack.c.b16 %v1094, %v1093
    %v1391 = vpack.c.b16 %v1096, %v1095
    %v1392 = vpack.c.b16 %v1098, %v1097
    %v1393 = vpack.c.b16 %v1100, %v1099
    %v1394 = vpack.c.b16 %v1102, %v1101
    %v1395 = vpack.c.b16 %v1104, %v1103
    %v1396 = vpack.c.b16 %v1106, %v1105
    %v1397 = vpack.c.b16 %v1108, %v1107
    %v1398 = vpack.c.b16 %v1110, %v1109
    %v1399 = vpack.c.b16 %v1112, %v1111
    %v1400 = vpack.c.b16 %v1114, %v1113
    %v1401 = vpack.c.b16 %v1116, %v1115
    %v1402 = vpack.c.b16 %v1118, %v1117
    %v1403 = vpack.c.b16 %v1120, %v1119
    %v1404 = vpack.c.b16 %v1122, %v1121
    %v1405 = vpack.c.b16 %v1124, %v1123
    %v1406 = vpack.c.b16 %v1126, %v1125
    %v1407 = vpack.c.b16 %v1128, %v1127
    %v1408 = vpack.c.b16 %v1130, %v1129
    %v1409 = vpack.c.b16 %v1132, %v1131
    %v1410 = vpack.c.b16 %v1134, %v1133
    %v1411 = vpack.c.b16 %v1136, %v1135
    %v1412 = vpack.c.b16 %v1138, %v1137
    %v1413 = vpack.c.b16 %v1140, %v1139
    %v1414 = vpack.c.b16 %v1142, %v1141
    %v1415 = vpack.c.b16 %v1144, %v1143
    %v1416 = vpack.c.b16 %v1146, %v1145
    %v1417 = vpack.c.b16 %v1148, %v1147
    %v1418 = vpack.c.b16 %v1150, %v1149
    %v1419 = vpack.c.b16 %v1152, %v1151
    %v1420 = vpack.c.b16 %v1154, %v1153
    %v1421 = vpack.c.b16 %v1156, %v1155
    %v1422 = vpack.c.b16 %v1158, %v1157
    %v1423 = vpack.c.b16 %v1160, %v1159
    %v1424 = vpack.c.b16 %v1162, %v1161
    %v1425 = vpack.c.b16 %v1164, %v1163
    %v1426 = vpack.c.b16 %v1166, %v1165
    %v1427 = vpack.c.b16 %v1168, %v1167
    %v1428 = vpack.c.b16 %v1170, %v1169
    %v1429 = vpack.c.b16 %v1172, %v1171
    %v1430 = vpack.c.b16 %v1174, %v1173
    %v1431 = vpack.c.b16 %v1176, %v1175
    %v1432 = vpack.c.b16 %v1178, %v1177
    %v1433 = vpack.c.b16 %v1180, %v1179
    %v1434 = vpack.c.b16 %v1182, %v1181
    %v1435 = vpack.c.b16 %v1184, %v1183
    %v1436 = vpack.c.b16 %v1186, %v1185
    %v1437 = vpack.c.b16 %v1188, %v1187
    %v1438 = vpack.c.b16 %v1190, %v1189
    %v1439 = vpack.c.b16 %v1192, %v1191
    %v1440 = vpack.c.b16 %v1194, %v1193
    %v1441 = vpack.c.b16 %v1196, %v1195
    %v1442 = vpack.c.b16 %v1198, %v1197
    %v1443 = vpack.c.b16 %v1200, %v1199
    %v1444 = vpack.c.b16 %v1202, %v1201
    %v1445 = vpack.c.b16 %v1204, %v1203
    %v1446 = vpack.c.b16 %v1206, %v1205
    %v1447 = vpack.c.b16 %v1208, %v1207
    %v1448 = vpack.c.b16 %v1210, %v1209
    %v1449 = vpack.c.b16 %v1212, %v1211
    %v1450 = vpack.c.b16 %v1214, %v1213
    %v1451 = vpack.c.b16 %v1216, %v1215
    %v1452 = vpack.c.b16 %v1218, %v1217
    %v1453 = vpack.c.b16 %v1220, %v1219
    %v1454 = vpack.c.b16 %v1222, %v1221
    %v1455 = vpack.c.b16 %v1224, %v1223
    %v1456 = vpack.c.b16 %v1226, %v1225
    %v1457 = vpack.c.b16 %v1228, %v1227
    %v1458 = vpack.c.b16 %v1230, %v1229
    %v1459 = vpack.c.b16 %v1232, %v1231
    %v1460 = vpack.c.b16 %v1234, %v1233
    %v1461 = vpack.c.b16 %v1236, %v1235
    %v1462 = vpack.c.b16 %v1238, %v1237
    %v1463 = vpack.c.b16 %v1240, %v1239
    %v1464 = vpack.c.b16 %v1242, %v1241
    %v1465 = vpack.c.b16 %v1244, %v1243
    %v1466 = vpack.c.b16 %v1246, %v1245
    %v1467 = vpack.c.b16 %v1248, %v1247
    %v1468 = vpack.c.b16 %v1250, %v1249
    %v1469 = vpack.c.b16 %v1252, %v1251
    %v1470 = vpack.c.b16 %v1254, %v1253
    %v1471 = vpack.c.b16 %v1256, %v1255
    %v1472 = vpack.c.b16 %v1258, %v1257
    %v1473 = vpack.c.b16 %v1260, %v1259
    %v1474 = vpack.c.b16 %v1262, %v1261
    %v1475 = vpack.c.b16 %v1264, %v1263
    %v1476 = vpack.c.b16 %v1266, %v1265
    %v1477 = vpack.c.b16 %v1268, %v1267
    %v1478 = vpack.c.b16 %v1270, %v1269
    %v1479 = vpack.c.b16 %v1272, %v1271
    %v1480 = vpack.c.b16 %v1274, %v1273
    %v1481 = vpack.c.b16 %v1276, %v1275
    %v1482 = vpack.c.b16 %v1278, %v1277
    %v1483 = vpack.c.b16 %v1280, %v1279
    %v1484 = vpack.c.b16 %v1282, %v1281
    %v1485 = vpack.c.b16 %v1284, %v1283
    %v1486 = vpack.c.b16 %v1286, %v1285
    %v1487 = vpack.c.b16 %v1288, %v1287
    %v1488 = vpack.c.b16 %v1290, %v1289
    %v1489 = vpack.c.b16 %v1292, %v1291
    %v1490 = vpack.c.b16 %v1294, %v1293
    %v1491 = vpack.c.b16 %v1296, %v1295
    %v1492 = vpack.c.b16 %v1298, %v1297
    %v1493 = vpack.c.b16 %v1300, %v1299
    %v1494 = vpack.c.b16 %v1302, %v1301
    %v1495 = vpack.c.b16 %v1304, %v1303
    %v1496 = vpack.c.b16 %v1306, %v1305
    %v1497 = vpack.c.b16 %v1308, %v1307
    %v1498 = vpack.c.b16 %v1310, %v1309
    %v1499 = vpack.c.b16 %v1312, %v1311
    %v1500 = vpack.c.b16 %v1314, %v1313
    %v1501 = vpack.c.b16 %v1316, %v1315
    %v1502 = vpack.c.b16 %v1318, %v1317
    %v1503 = vpack.c.b16 %v1320, %v1319
    %v1504 = vpack.c.b16 %v1322, %v1321
    %v1505 = vpack.c.b16 %v1324, %v1323
    %v1506 = vpack.c.b16 %v1326, %v1325
    %v1507 = vpack.c.b16 %v1328, %v1327
    %v1508 = vpack.c.b16 %v1330, %v1329
    %v1509 = vpack.c.b16 %v1332, %v1331
    %v1510 = vpack.c.b16 %v1334, %v1333
    %v1511 = vpack.c.b16 %v1336, %v1335
    %v1512 = vpack.c.b16 %v1338, %v1337
    %v1513 = vpack.c.b16 %v1340, %v1339
    %v1514 = vpack.c.b16 %v1342, %v1341
    %v1515 = vpack.c.b16 %v1344, %v1343
    %v1516 = vpack.c.b16 %v1346, %v1345
    %v1517 = vpack.c.b16 %v1348, %v1347
    %v1518 = vpack.c.b16 %v1350, %v1349
    %v1519 = vpack.c.b16 %v1352, %v1351
    %v1520 = vpack.c.b16 %v1354, %v1353
    %v1521 = vpack.c.b16 %v1356, %v1355
    %v1522 = vpack.c.b16 %v1358, %v1357
    %v1523 = vpack.c.b16 %v1360, %v1359
    %v1524 = vpack.c.b16 %v1362, %v1361
    %v1525 = vpack.c.b16 %v1364, %v1363
    %v1526 = vpack.c.b16 %v1366, %v1365
    %v1527 = vpack.c.b16 %v1368, %v1367
    %v1528 = vpack.c.b16 %v1370, %v1369
    %v1529 = vpack.c.b16 %v1372, %v1371
    %v1530 = vpack.c.b16 %v1374, %v1373
    %v1531 = vpack.c.b16 %v1376, %v1375
    %v1532 = vpack.c.b16 %v1378, %v1377
    %v1533 = vpack.c.b16 %v1380, %v1379
    %v1534 = vpack.c.b16 %v1382, %v1381
    %1687 = vmatprep.subr.bf16.mxu0 0
    %1688 = vmatpush1.bf16.msra.mxu0 %v1383
    %1689 = vmatprep.subr.bf16.mxu0 0
    %1690 = vmatpush1.bf16.msra.mxu0 %v1384
    %1691 = vmatprep.subr.bf16.mxu0 0
    %1692 = vmatpush1.bf16.msra.mxu0 %v1385
    %1693 = vmatprep.subr.bf16.mxu0 0
    %1694 = vmatpush1.bf16.msra.mxu0 %v1386
    %1695 = vmatprep.subr.bf16.mxu0 0
    %1696 = vmatpush1.bf16.msra.mxu0 %v1387
    %1697 = vmatprep.subr.bf16.mxu0 0
    %1698 = vmatpush1.bf16.msra.mxu0 %v1388
    %1699 = vmatprep.subr.bf16.mxu0 0
    %1700 = vmatpush1.bf16.msra.mxu0 %v1389
    %1701 = vmatprep.subr.bf16.mxu0 0
    %1702 = vmatpush1.bf16.msra.mxu0 %v1390
    %1703 = vmatprep.subr.bf16.mxu0 0
    %1704 = vmatpush1.bf16.msra.mxu0 %v1391
    %1705 = vmatprep.subr.bf16.mxu0 0
    %1706 = vmatpush1.bf16.msra.mxu0 %v1392
    %1707 = vmatprep.subr.bf16.mxu0 0
    %1708 = vmatpush1.bf16.msra.mxu0 %v1393
    %1709 = vmatprep.subr.bf16.mxu0 0
    %1710 = vmatpush1.bf16.msra.mxu0 %v1394
    %1711 = vmatprep.subr.bf16.mxu0 0
    %1712 = vmatpush1.bf16.msra.mxu0 %v1395
    %1713 = vmatprep.subr.bf16.mxu0 0
    %1714 = vmatpush1.bf16.msra.mxu0 %v1396
    %1715 = vmatprep.subr.bf16.mxu0 0
    %1716 = vmatpush1.bf16.msra.mxu0 %v1397
    %1717 = vmatprep.subr.bf16.mxu0 0
    %1718 = vmatpush1.bf16.msra.mxu0 %v1398
    %1719 = vmatprep.mubr.bf16.mxu0 %v453
    %1720 = vmatmul.mubr.bf16.gmra.mrb[0].mxu0 %v452
    %v1721 = vpop.f32.mrb[0].mxu0
    %v1722 = vadd.f32 0.0, %v1721
    %v1723 = vpop.f32.mrb[0].mxu0
    %v1724 = vpop.f32.mrb[0].mxu0
    %v1725 = vadd.f32 0.0, %v1724
    %v1726 = vpop.f32.mrb[0].mxu0
    %1727 = vdwg.mxu0
    %1728 = vmatprep.subr.bf16.mxu0 0
    %1729 = vmatpush1.bf16.msra.mxu0 %v1399
    %1730 = vmatprep.subr.bf16.mxu0 0
    %1731 = vmatpush1.bf16.msra.mxu0 %v1400
    %1732 = vmatprep.subr.bf16.mxu0 0
    %1733 = vmatpush1.bf16.msra.mxu0 %v1401
    %1734 = vmatprep.subr.bf16.mxu0 0
    %1735 = vmatpush1.bf16.msra.mxu0 %v1402
    %1736 = vmatprep.subr.bf16.mxu0 0
    %1737 = vmatpush1.bf16.msra.mxu0 %v1403
    %1738 = vmatprep.subr.bf16.mxu0 0
    %1739 = vmatpush1.bf16.msra.mxu0 %v1404
    %1740 = vmatprep.subr.bf16.mxu0 0
    %1741 = vmatpush1.bf16.msra.mxu0 %v1405
    %1742 = vmatprep.subr.bf16.mxu0 0
    %1743 = vmatpush1.bf16.msra.mxu0 %v1406
    %1744 = vmatprep.subr.bf16.mxu0 0
    %1745 = vmatpush1.bf16.msra.mxu0 %v1407
    %1746 = vmatprep.subr.bf16.mxu0 0
    %1747 = vmatpush1.bf16.msra.mxu0 %v1408
    %1748 = vmatprep.subr.bf16.mxu0 0
    %1749 = vmatpush1.bf16.msra.mxu0 %v1409
    %1750 = vmatprep.subr.bf16.mxu0 0
    %1751 = vmatpush1.bf16.msra.mxu0 %v1410
    %1752 = vmatprep.subr.bf16.mxu0 0
    %1753 = vmatpush1.bf16.msra.mxu0 %v1411
    %1754 = vmatprep.subr.bf16.mxu0 0
    %1755 = vmatpush1.bf16.msra.mxu0 %v1412
    %1756 = vmatprep.subr.bf16.mxu0 0
    %1757 = vmatpush1.bf16.msra.mxu0 %v1413
    %1758 = vmatprep.subr.bf16.mxu0 0
    %1759 = vmatpush1.bf16.msra.mxu0 %v1414
    %1760 = vmatprep.mubr.bf16.mxu0 %v455
    %1761 = vmatmul.mubr.bf16.gmra.mrb[0].mxu0 %v454
    %v1762 = vpop.f32.mrb[0].mxu0
    %v1763 = vadd.f32 %v1722, %v1762
    %v1764 = vpop.f32.mrb[0].mxu0
    %v1765 = vpop.f32.mrb[0].mxu0
    %v1766 = vadd.f32 %v1725, %v1765
    %v1767 = vpop.f32.mrb[0].mxu0
    %1768 = vdwg.mxu0
    %1769 = vmatprep.subr.bf16.mxu0 0
    %1770 = vmatpush1.bf16.msra.mxu0 %v1415
    %1771 = vmatprep.subr.bf16.mxu0 0
    %1772 = vmatpush1.bf16.msra.mxu0 %v1416
    %1773 = vmatprep.subr.bf16.mxu0 0
    %1774 = vmatpush1.bf16.msra.mxu0 %v1417
    %1775 = vmatprep.subr.bf16.mxu0 0
    %1776 = vmatpush1.bf16.msra.mxu0 %v1418
    %1777 = vmatprep.subr.bf16.mxu0 0
    %1778 = vmatpush1.bf16.msra.mxu0 %v1419
    %1779 = vmatprep.subr.bf16.mxu0 0
    %1780 = vmatpush1.bf16.msra.mxu0 %v1420
    %1781 = vmatprep.subr.bf16.mxu0 0
    %1782 = vmatpush1.bf16.msra.mxu0 %v1421
    %1783 = vmatprep.subr.bf16.mxu0 0
    %1784 = vmatpush1.bf16.msra.mxu0 %v1422
    %1785 = vmatprep.subr.bf16.mxu0 0
    %1786 = vmatpush1.bf16.msra.mxu0 %v1423
    %1787 = vmatprep.subr.bf16.mxu0 0
    %1788 = vmatpush1.bf16.msra.mxu0 %v1424
    %1789 = vmatprep.subr.bf16.mxu0 0
    %1790 = vmatpush1.bf16.msra.mxu0 %v1425
    %1791 = vmatprep.subr.bf16.mxu0 0
    %1792 = vmatpush1.bf16.msra.mxu0 %v1426
    %1793 = vmatprep.subr.bf16.mxu0 0
    %1794 = vmatpush1.bf16.msra.mxu0 %v1427
    %1795 = vmatprep.subr.bf16.mxu0 0
    %1796 = vmatpush1.bf16.msra.mxu0 %v1428
    %1797 = vmatprep.subr.bf16.mxu0 0
    %1798 = vmatpush1.bf16.msra.mxu0 %v1429
    %1799 = vmatprep.subr.bf16.mxu0 0
    %1800 = vmatpush1.bf16.msra.mxu0 %v1430
    %1801 = vmatprep.mubr.bf16.mxu0 %v457
    %1802 = vmatmul.mubr.bf16.gmra.mrb[0].mxu0 %v456
    %v1803 = vpop.f32.mrb[0].mxu0
    %v1804 = vadd.f32 %v1763, %v1803
    %v1805 = vpop.f32.mrb[0].mxu0
    %v1806 = vpop.f32.mrb[0].mxu0
    %v1807 = vadd.f32 %v1766, %v1806
    %v1808 = vpop.f32.mrb[0].mxu0
    %1809 = vdwg.mxu0
    %1810 = vmatprep.subr.bf16.mxu0 0
    %1811 = vmatpush1.bf16.msra.mxu0 %v1431
    %1812 = vmatprep.subr.bf16.mxu0 0
    %1813 = vmatpush1.bf16.msra.mxu0 %v1432
    %1814 = vmatprep.subr.bf16.mxu0 0
    %1815 = vmatpush1.bf16.msra.mxu0 %v1433
    %1816 = vmatprep.subr.bf16.mxu0 0
    %1817 = vmatpush1.bf16.msra.mxu0 %v1434
    %1818 = vmatprep.subr.bf16.mxu0 0
    %1819 = vmatpush1.bf16.msra.mxu0 %v1435
    %1820 = vmatprep.subr.bf16.mxu0 0
    %1821 = vmatpush1.bf16.msra.mxu0 %v1436
    %1822 = vmatprep.subr.bf16.mxu0 0
    %1823 = vmatpush1.bf16.msra.mxu0 %v1437
    %1824 = vmatprep.subr.bf16.mxu0 0
    %1825 = vmatpush1.bf16.msra.mxu0 %v1438
    %1826 = vmatprep.subr.bf16.mxu0 0
    %1827 = vmatpush1.bf16.msra.mxu0 %v1439
    %1828 = vmatprep.subr.bf16.mxu0 0
    %1829 = vmatpush1.bf16.msra.mxu0 %v1440
    %1830 = vmatprep.subr.bf16.mxu0 0
    %1831 = vmatpush1.bf16.msra.mxu0 %v1441
    %1832 = vmatprep.subr.bf16.mxu0 0
    %1833 = vmatpush1.bf16.msra.mxu0 %v1442
    %1834 = vmatprep.subr.bf16.mxu0 0
    %1835 = vmatpush1.bf16.msra.mxu0 %v1443
    %1836 = vmatprep.subr.bf16.mxu0 0
    %1837 = vmatpush1.bf16.msra.mxu0 %v1444
    %1838 = vmatprep.subr.bf16.mxu0 0
    %1839 = vmatpush1.bf16.msra.mxu0 %v1445
    %1840 = vmatprep.subr.bf16.mxu0 0
    %1841 = vmatpush1.bf16.msra.mxu0 %v1446
    %1842 = vmatprep.mubr.bf16.mxu0 %v459
    %1843 = vmatmul.mubr.bf16.gmra.mrb[0].mxu0 %v458
    %v1844 = vpop.f32.mrb[0].mxu0
    %v1845 = vadd.f32 %v1804, %v1844
    %v1846 = vpop.f32.mrb[0].mxu0
    %v1847 = vpop.f32.mrb[0].mxu0
    %v1848 = vadd.f32 %v1807, %v1847
    %v1849 = vpop.f32.mrb[0].mxu0
    %1850 = vdwg.mxu0
    %1851 = vmatprep.subr.bf16.mxu0 0
    %1852 = vmatpush1.bf16.msra.mxu0 %v1447
    %1853 = vmatprep.subr.bf16.mxu0 0
    %1854 = vmatpush1.bf16.msra.mxu0 %v1448
    %1855 = vmatprep.subr.bf16.mxu0 0
    %1856 = vmatpush1.bf16.msra.mxu0 %v1449
    %1857 = vmatprep.subr.bf16.mxu0 0
    %1858 = vmatpush1.bf16.msra.mxu0 %v1450
    %1859 = vmatprep.subr.bf16.mxu0 0
    %1860 = vmatpush1.bf16.msra.mxu0 %v1451
    %1861 = vmatprep.subr.bf16.mxu0 0
    %1862 = vmatpush1.bf16.msra.mxu0 %v1452
    %1863 = vmatprep.subr.bf16.mxu0 0
    %1864 = vmatpush1.bf16.msra.mxu0 %v1453
    %1865 = vmatprep.subr.bf16.mxu0 0
    %1866 = vmatpush1.bf16.msra.mxu0 %v1454
    %1867 = vmatprep.subr.bf16.mxu0 0
    %1868 = vmatpush1.bf16.msra.mxu0 %v1455
    %1869 = vmatprep.subr.bf16.mxu0 0
    %1870 = vmatpush1.bf16.msra.mxu0 %v1456
    %1871 = vmatprep.subr.bf16.mxu0 0
    %1872 = vmatpush1.bf16.msra.mxu0 %v1457
    %1873 = vmatprep.subr.bf16.mxu0 0
    %1874 = vmatpush1.bf16.msra.mxu0 %v1458
    %1875 = vmatprep.subr.bf16.mxu0 0
    %1876 = vmatpush1.bf16.msra.mxu0 %v1459
    %1877 = vmatprep.subr.bf16.mxu0 0
    %1878 = vmatpush1.bf16.msra.mxu0 %v1460
    %1879 = vmatprep.subr.bf16.mxu0 0
    %1880 = vmatpush1.bf16.msra.mxu0 %v1461
    %1881 = vmatprep.subr.bf16.mxu0 0
    %1882 = vmatpush1.bf16.msra.mxu0 %v1462
    %1883 = vmatprep.mubr.bf16.mxu0 %v461
    %1884 = vmatmul.mubr.bf16.gmra.mrb[0].mxu0 %v460
    %v1885 = vpop.f32.mrb[0].mxu0
    %v1886 = vadd.f32 %v1845, %v1885
    %v1887 = vpop.f32.mrb[0].mxu0
    %v1888 = vpop.f32.mrb[0].mxu0
    %v1889 = vadd.f32 %v1848, %v1888
    %v1890 = vpop.f32.mrb[0].mxu0
    %1891 = vdwg.mxu0
    %1892 = vmatprep.subr.bf16.mxu0 0
    %1893 = vmatpush1.bf16.msra.mxu0 %v1463
    %1894 = vmatprep.subr.bf16.mxu0 0
    %1895 = vmatpush1.bf16.msra.mxu0 %v1464
    %1896 = vmatprep.subr.bf16.mxu0 0
    %1897 = vmatpush1.bf16.msra.mxu0 %v1465
    %1898 = vmatprep.subr.bf16.mxu0 0
    %1899 = vmatpush1.bf16.msra.mxu0 %v1466
    %1900 = vmatprep.subr.bf16.mxu0 0
    %1901 = vmatpush1.bf16.msra.mxu0 %v1467
    %1902 = vmatprep.subr.bf16.mxu0 0
    %1903 = vmatpush1.bf16.msra.mxu0 %v1468
    %1904 = vmatprep.subr.bf16.mxu0 0
    %1905 = vmatpush1.bf16.msra.mxu0 %v1469
    %1906 = vmatprep.subr.bf16.mxu0 0
    %1907 = vmatpush1.bf16.msra.mxu0 %v1470
    %1908 = vmatprep.subr.bf16.mxu0 0
    %1909 = vmatpush1.bf16.msra.mxu0 %v1471
    %1910 = vmatprep.subr.bf16.mxu0 0
    %1911 = vmatpush1.bf16.msra.mxu0 %v1472
    %1912 = vmatprep.subr.bf16.mxu0 0
    %1913 = vmatpush1.bf16.msra.mxu0 %v1473
    %1914 = vmatprep.subr.bf16.mxu0 0
    %1915 = vmatpush1.bf16.msra.mxu0 %v1474
    %1916 = vmatprep.subr.bf16.mxu0 0
    %1917 = vmatpush1.bf16.msra.mxu0 %v1475
    %1918 = vmatprep.subr.bf16.mxu0 0
    %1919 = vmatpush1.bf16.msra.mxu0 %v1476
    %1920 = vmatprep.subr.bf16.mxu0 0
    %1921 = vmatpush1.bf16.msra.mxu0 %v1477
    %1922 = vmatprep.subr.bf16.mxu0 0
    %1923 = vmatpush1.bf16.msra.mxu0 %v1478
    %1924 = vmatprep.mubr.bf16.mxu0 %v463
    %1925 = vmatmul.mubr.bf16.gmra.mrb[0].mxu0 %v462
    %v1926 = vpop.f32.mrb[0].mxu0
    %v1927 = vadd.f32 %v1886, %v1926
    %v1928 = vpop.f32.mrb[0].mxu0
    %v1929 = vpop.f32.mrb[0].mxu0
    %v1930 = vadd.f32 %v1889, %v1929
    %v1931 = vpop.f32.mrb[0].mxu0
    %1932 = vdwg.mxu0
    %1933 = vmatprep.subr.bf16.mxu0 0
    %1934 = vmatpush1.bf16.msra.mxu0 %v1479
    %1935 = vmatprep.subr.bf16.mxu0 0
    %1936 = vmatpush1.bf16.msra.mxu0 %v1480
    %1937 = vmatprep.subr.bf16.mxu0 0
    %1938 = vmatpush1.bf16.msra.mxu0 %v1481
    %1939 = vmatprep.subr.bf16.mxu0 0
    %1940 = vmatpush1.bf16.msra.mxu0 %v1482
    %1941 = vmatprep.subr.bf16.mxu0 0
    %1942 = vmatpush1.bf16.msra.mxu0 %v1483
    %1943 = vmatprep.subr.bf16.mxu0 0
    %1944 = vmatpush1.bf16.msra.mxu0 %v1484
    %1945 = vmatprep.subr.bf16.mxu0 0
    %1946 = vmatpush1.bf16.msra.mxu0 %v1485
    %1947 = vmatprep.subr.bf16.mxu0 0
    %1948 = vmatpush1.bf16.msra.mxu0 %v1486
    %1949 = vmatprep.subr.bf16.mxu0 0
    %1950 = vmatpush1.bf16.msra.mxu0 %v1487
    %1951 = vmatprep.subr.bf16.mxu0 0
    %1952 = vmatpush1.bf16.msra.mxu0 %v1488
    %1953 = vmatprep.subr.bf16.mxu0 0
    %1954 = vmatpush1.bf16.msra.mxu0 %v1489
    %1955 = vmatprep.subr.bf16.mxu0 0
    %1956 = vmatpush1.bf16.msra.mxu0 %v1490
    %1957 = vmatprep.subr.bf16.mxu0 0
    %1958 = vmatpush1.bf16.msra.mxu0 %v1491
    %1959 = vmatprep.subr.bf16.mxu0 0
    %1960 = vmatpush1.bf16.msra.mxu0 %v1492
    %1961 = vmatprep.subr.bf16.mxu0 0
    %1962 = vmatpush1.bf16.msra.mxu0 %v1493
    %1963 = vmatprep.subr.bf16.mxu0 0
    %1964 = vmatpush1.bf16.msra.mxu0 %v1494
    %1965 = vmatprep.mubr.bf16.mxu0 %v465
    %1966 = vmatmul.mubr.bf16.gmra.mrb[0].mxu0 %v464
    %v1967 = vpop.f32.mrb[0].mxu0
    %v1968 = vadd.f32 %v1927, %v1967
    %v1969 = vpop.f32.mrb[0].mxu0
    %v1970 = vpop.f32.mrb[0].mxu0
    %v1971 = vadd.f32 %v1930, %v1970
    %v1972 = vpop.f32.mrb[0].mxu0
    %1973 = vdwg.mxu0
    %1974 = vmatprep.subr.bf16.mxu0 0
    %1975 = vmatpush1.bf16.msra.mxu0 %v1495
    %1976 = vmatprep.subr.bf16.mxu0 0
    %1977 = vmatpush1.bf16.msra.mxu0 %v1496
    %1978 = vmatprep.subr.bf16.mxu0 0
    %1979 = vmatpush1.bf16.msra.mxu0 %v1497
    %1980 = vmatprep.subr.bf16.mxu0 0
    %1981 = vmatpush1.bf16.msra.mxu0 %v1498
    %1982 = vmatprep.subr.bf16.mxu0 0
    %1983 = vmatpush1.bf16.msra.mxu0 %v1499
    %1984 = vmatprep.subr.bf16.mxu0 0
    %1985 = vmatpush1.bf16.msra.mxu0 %v1500
    %1986 = vmatprep.subr.bf16.mxu0 0
    %1987 = vmatpush1.bf16.msra.mxu0 %v1501
    %1988 = vmatprep.subr.bf16.mxu0 0
    %1989 = vmatpush1.bf16.msra.mxu0 %v1502
    %1990 = vmatprep.subr.bf16.mxu0 0
    %1991 = vmatpush1.bf16.msra.mxu0 %v1503
    %1992 = vmatprep.subr.bf16.mxu0 0
    %1993 = vmatpush1.bf16.msra.mxu0 %v1504
    %1994 = vmatprep.subr.bf16.mxu0 0
    %1995 = vmatpush1.bf16.msra.mxu0 %v1505
    %1996 = vmatprep.subr.bf16.mxu0 0
    %1997 = vmatpush1.bf16.msra.mxu0 %v1506
    %1998 = vmatprep.subr.bf16.mxu0 0
    %1999 = vmatpush1.bf16.msra.mxu0 %v1507
    %2000 = vmatprep.subr.bf16.mxu0 0
    %2001 = vmatpush1.bf16.msra.mxu0 %v1508
    %2002 = vmatprep.subr.bf16.mxu0 0
    %2003 = vmatpush1.bf16.msra.mxu0 %v1509
    %2004 = vmatprep.subr.bf16.mxu0 0
    %2005 = vmatpush1.bf16.msra.mxu0 %v1510
    %2006 = vmatprep.mubr.bf16.mxu0 %v467
    %2007 = vmatmul.mubr.bf16.gmra.mrb[0].mxu0 %v466
    %v2008 = vpop.f32.mrb[0].mxu0
    %v2009 = vadd.f32 %v1968, %v2008
    %v2010 = vpop.f32.mrb[0].mxu0
    %v2011 = vpop.f32.mrb[0].mxu0
    %v2012 = vadd.f32 %v1971, %v2011
    %v2013 = vpop.f32.mrb[0].mxu0
    %2014 = vdwg.mxu0
    %2015 = vmatprep.subr.bf16.mxu0 0
    %2016 = vmatpush1.bf16.msra.mxu0 %v1511
    %2017 = vmatprep.subr.bf16.mxu0 0
    %2018 = vmatpush1.bf16.msra.mxu0 %v1512
    %2019 = vmatprep.subr.bf16.mxu0 0
    %2020 = vmatpush1.bf16.msra.mxu0 %v1513
    %2021 = vmatprep.subr.bf16.mxu0 0
    %2022 = vmatpush1.bf16.msra.mxu0 %v1514
    %2023 = vmatprep.subr.bf16.mxu0 0
    %2024 = vmatpush1.bf16.msra.mxu0 %v1515
    %2025 = vmatprep.subr.bf16.mxu0 0
    %2026 = vmatpush1.bf16.msra.mxu0 %v1516
    %2027 = vmatprep.subr.bf16.mxu0 0
    %2028 = vmatpush1.bf16.msra.mxu0 %v1517
    %2029 = vmatprep.subr.bf16.mxu0 0
    %2030 = vmatpush1.bf16.msra.mxu0 %v1518
    %2031 = vmatprep.subr.bf16.mxu0 0
    %2032 = vmatpush1.bf16.msra.mxu0 %v1519
    %2033 = vmatprep.subr.bf16.mxu0 0
    %2034 = vmatpush1.bf16.msra.mxu0 %v1520
    %2035 = vmatprep.subr.bf16.mxu0 0
    %2036 = vmatpush1.bf16.msra.mxu0 %v1521
    %2037 = vmatprep.subr.bf16.mxu0 0
    %2038 = vmatpush1.bf16.msra.mxu0 %v1522
    %2039 = vmatprep.subr.bf16.mxu0 0
    %2040 = vmatpush1.bf16.msra.mxu0 %v1523
    %2041 = vmatprep.subr.bf16.mxu0 0
    %2042 = vmatpush1.bf16.msra.mxu0 %v1524
    %2043 = vmatprep.subr.bf16.mxu0 0
    %2044 = vmatpush1.bf16.msra.mxu0 %v1525
    %2045 = vmatprep.subr.bf16.mxu0 0
    %2046 = vmatpush1.bf16.msra.mxu0 %v1526
    %2047 = vmatprep.mubr.bf16.mxu0 %v469
    %2048 = vmatmul.mubr.bf16.gmra.mrb[0].mxu0 %v468
    %v2049 = vpop.f32.mrb[0].mxu0
    %v2050 = vadd.f32 %v2009, %v2049
    %v2051 = vpop.f32.mrb[0].mxu0
    %v2052 = vpop.f32.mrb[0].mxu0
    %v2053 = vadd.f32 %v2012, %v2052
    %v2054 = vpop.f32.mrb[0].mxu0
    %2055 = vdwg.mxu0
    %2056 = vmatprep.subr.bf16.mxu0 0
    %2057 = vmatpush1.bf16.msra.mxu0 %v1527
    %2058 = vmatprep.subr.bf16.mxu0 0
    %2059 = vmatpush1.bf16.msra.mxu0 %v1528
    %2060 = vmatprep.subr.bf16.mxu0 0
    %2061 = vmatpush1.bf16.msra.mxu0 %v1529
    %2062 = vmatprep.subr.bf16.mxu0 0
    %2063 = vmatpush1.bf16.msra.mxu0 %v1530
    %2064 = vmatprep.subr.bf16.mxu0 0
    %2065 = vmatpush1.bf16.msra.mxu0 %v1531
    %2066 = vmatprep.subr.bf16.mxu0 0
    %2067 = vmatpush1.bf16.msra.mxu0 %v1532
    %2068 = vmatprep.subr.bf16.mxu0 0
    %2069 = vmatpush1.bf16.msra.mxu0 %v1533
    %2070 = vmatprep.subr.bf16.mxu0 0
    %2071 = vmatpush1.bf16.msra.mxu0 %v1534
    %2072 = vmatprep.subr.bf16.mxu0 0
    %2073 = vmatpush1.bf16.msra.mxu0 0
    %2074 = vmatprep.subr.bf16.mxu0 0
    %2075 = vmatpush1.bf16.msra.mxu0 0
    %2076 = vmatprep.subr.bf16.mxu0 0
    %2077 = vmatpush1.bf16.msra.mxu0 0
    %2078 = vmatprep.subr.bf16.mxu0 0
    %2079 = vmatpush1.bf16.msra.mxu0 0
    %2080 = vmatprep.subr.bf16.mxu0 0
    %2081 = vmatpush1.bf16.msra.mxu0 0
    %2082 = vmatprep.subr.bf16.mxu0 0
    %2083 = vmatpush1.bf16.msra.mxu0 0
    %2084 = vmatprep.subr.bf16.mxu0 0
    %2085 = vmatpush1.bf16.msra.mxu0 0
    %2086 = vmatprep.subr.bf16.mxu0 0
    %2087 = vmatpush1.bf16.msra.mxu0 0
    %2088 = vmatprep.mubr.bf16.mxu0 0
    %2089 = vmatmul.mubr.bf16.gmra.mrb[0].mxu0 %v470
    %v2090 = vpop.f32.mrb[0].mxu0
    %v2091 = vadd.f32 %v2050, %v2090
    %v2092 = vpop.f32.mrb[0].mxu0
    %v2093 = vpop.f32.mrb[0].mxu0
    %v2094 = vadd.f32 %v2053, %v2093
    %v2095 = vpop.f32.mrb[0].mxu0
    %2096 = vdwg.mxu0
    %2097 = vst [vmem:[#allocation6] sm:$0xff] %v2091
    %2098 = vst [vmem:[#allocation6 + $0x8] sm:$0xff] %v2094
    // Predicated region
    $region18: #{tpu_custom_call.1} parent=1 // pred_check
      _
    $region19: #{tpu_custom_call.1} parent=1 // pred_check_branch
      %2100 = sbr.rel (0) target = $region21
    $region20: #{tpu_custom_call.1} parent=1 // pred_region
      %s2102 = ssub.s32 256, 256
      %2103 = vsyncadd [#allocation5], %s2102
      %s2104 = sshll.u32 [#allocation6], 4
      %s2105 = int_to_ptr.vmem [resolvable:$true] %s2104
      %2110 = dma.vmem_to_hbm [thread:$0]  %s2105, 256, %s3, [#allocation5], 128, 128, 8
    $region21: #{tpu_custom_call.1} parent=1 // pred_fallthru
      _
    // Predicated region
    $region22: #{tpu_custom_call.1} parent=1 // pred_check
      _
    $region23: #{tpu_custom_call.1} parent=1 // pred_check_branch
      %2112 = sbr.rel (0) target = $region25
    $region24: #{tpu_custom_call.1} parent=1 // pred_region
      %2113 = dma.done [#allocation5], 256
    $region25: #{tpu_custom_call.1} parent=1 // pred_fallthru
      _
    %2114 = vsyncpa [#allocation4], 1
    %2115 = vsyncpa [#allocation5], 1

</llo_original>
